<compile_context>
chip_gen: v5e
topology: v5e:2x2
jax: 0.10.0
libtpu: 0.0.40
codegen_flags: <defaults>
</compile_context>

<pallas_src>
import functools

import jax
import jax.numpy as jnp
import numpy as np
from jax.experimental import pallas as pl
from jax.experimental.pallas import tpu as pltpu

_LN_EPS = 1e-5


def _recon_head_kernel(x_ref, w1t_ref, b1_ref, gamma_ref, beta_ref,
                       wout_ref, bout_ref, o_ref, *, d_true, n_tokens,
                       transpose_out):
    TB, TT, Dp = x_ref.shape

    # ---- linear1 on the MXU: y = x @ W1^T + b1 (W1^T materialized once in the wrapper) ----
    x2d = x_ref[...].reshape(TB * TT, Dp)
    y = jnp.dot(x2d, w1t_ref[...], preferred_element_type=jnp.float32)
    y = y + b1_ref[...].astype(jnp.float32)                       # (1, Dp) broadcast

    # ---- fused LayerNorm (centered, eps=1e-5) + ReLU in f32 on the VPU -------------------
    # Padded feature lanes of y are exactly zero (zero-padded W1^T columns / b1), so sums over
    # the full lane width divided by the true d_in give exact statistics; the variance sum
    # masks the padded lanes (where y - mean == -mean).
    inv_d = jnp.float32(1.0 / d_true)
    mean = jnp.sum(y, axis=-1, keepdims=True) * inv_d
    centered = y - mean
    if d_true < Dp:
        lane = jax.lax.broadcasted_iota(jnp.int32, (1, Dp), 1)
        centered = jnp.where(lane < d_true, centered, 0.0)
    var = jnp.sum(centered * centered, axis=-1, keepdims=True) * inv_d
    scale = gamma_ref[...].astype(jnp.float32) * jax.lax.rsqrt(var + _LN_EPS)
    shift = beta_ref[...].astype(jnp.float32) - mean * scale
    h = jnp.maximum(y * scale + shift, 0.0)                       # normalize + ReLU
    # NOTE: when B % TB != 0 the padded rows of the last block run LN on undefined data; the
    # result is never stored (output block is clipped), so this is benign.

    # ---- d_out independent 1-wide heads: out[b, t] = <h[b, t, :], wout[t, :]> + bout[t] ----
    h3 = h.reshape(TB, TT, Dp)[:, :n_tokens, :]                   # drop dead CLS row if present
    out_bt = jnp.sum(h3 * wout_ref[...].astype(jnp.float32)[None], axis=-1)   # (TB, T)
    res = out_bt + bout_ref[...].astype(jnp.float32)              # (1, T) broadcast
    if transpose_out:
        o_ref[...] = res.T.astype(o_ref.dtype)                    # lane-dense [d_out, TB]
    else:
        o_ref[...] = res.astype(o_ref.dtype)                      # [TB, d_out], d_out >= 128


def _vmem_capacity_bytes():
    try:
        return int(pltpu.get_tpu_info().vmem_capacity_bytes)
    except Exception:
        return 64 * 1024 * 1024       # conservative fallback (v7x per-TC VMEM)


def reconstruction_head(x, w1, b1, gamma, beta, wout, bout, *, cls=True,
                        batch_tile=None, pad_features=True):
    """x: [B, S, d_in];  w1: [d_in, d_in] (PyTorch [out, in]);  wout: [d_out, d_in]."""
    B, S, D = x.shape
    T = S - 1 if cls else S
    assert w1.shape == (D, D) and wout.shape == (T, D)

    # One-time parameter layout fix (grid-invariant, done by XLA outside the kernel): consume
    # the weight in [in, out] layout so the kernel's dot needs no per-tile relayout.
    w1t = jnp.transpose(w1).astype(x.dtype)

    # Pad the feature (lane) axis to a multiple of 128.  Zero padding of the params makes the
    # extra lanes exact no-ops (kernel divides LN statistics by the true d_in).
    Dp = D
    if pad_features and D % 128 != 0:
        Dp = ((D + 127) // 128) * 128
        pad_d = Dp - D
        x = jnp.pad(x, ((0, 0), (0, 0), (0, pad_d)))
        w1t = jnp.pad(w1t, ((0, pad_d), (0, pad_d)))
        b1 = jnp.pad(b1, (0, pad_d))
        gamma = jnp.pad(gamma, (0, pad_d))
        beta = jnp.pad(beta, (0, pad_d))
        wout = jnp.pad(wout, ((0, 0), (0, pad_d)))

    # CLS drop without an HBM copy: either the token block excludes the CLS row directly
    # (T % 8 == 0) or it covers all S tokens and the dead row is sliced off in-kernel.
    if not cls:
        TT = S
    elif T % 8 == 0:
        TT = T
    else:
        TT = S

    # Output layout: lane-dense [d_out, B] when d_out is narrow, direct [B, d_out] otherwise.
    transpose_out = T < 128

    # ---- per-generation VMEM budget & batch-tile sizing ------------------------------------
    x_item = jnp.dtype(x.dtype).itemsize
    p_item = jnp.dtype(w1t.dtype).itemsize
    o_item = x_item
    vmem_cap = _vmem_capacity_bytes()
    scoped_cap = min(int(0.80 * vmem_cap), 110 * 1024 * 1024)   # ~51 MiB on v7x, ~102 MiB on v5e/v6e

    # Resident params (counted at 2 buffers in case single-buffering is unavailable).
    param_bytes = (Dp * Dp + 3 * Dp + T * Dp + T) * p_item
    # Per-batch-row working set: double-buffered x block + double-buffered out block + ~5 live
    # (TT, Dp) f32 temporaries (y, centered, h, head product, reshape copy).
    row_bytes = TT * Dp * (2 * x_item + 5 * 4) + T * 2 * o_item

    if batch_tile is None:
        budget = scoped_cap - 2 * param_bytes - (4 << 20)       # headroom for compiler scratch
        batch_tile = max(128, budget // max(row_bytes, 1))
    TB = int(min(batch_tile, 4096, B))
    if B >= 128:
        TB = max(128, (TB // 128) * 128)    # multiple of 128 -> unmasked lane-dense stores
    else:
        TB = B                              # tiny batch: one block covering all rows
    grid = (pl.cdiv(B, TB),)

    est = 2 * param_bytes + TB * row_bytes
    vmem_limit = int(min(scoped_cap, max(2 * est, 16 * 1024 * 1024)))

    if transpose_out:
        out_shape = jax.ShapeDtypeStruct((T, B), x.dtype)
        out_spec = pl.BlockSpec((T, TB), lambda i: (0, i))
    else:
        out_shape = jax.ShapeDtypeStruct((B, T), x.dtype)
        out_spec = pl.BlockSpec((TB, T), lambda i: (i, 0))

    kernel = functools.partial(_recon_head_kernel, d_true=D, n_tokens=T,
                               transpose_out=transpose_out)

    def build(single_buffer_params):
        def resident(shape):
            kwargs = {}
            if single_buffer_params:
                # Grid-invariant params: one VMEM copy instead of two pipeline buffers.
                kwargs["pipeline_mode"] = pl.Buffered(1)
            return pl.BlockSpec(shape, lambda i, _n=len(shape): (0,) * _n, **kwargs)

        # TODO(synk): for very large d_in (w1 >= ~32 MiB on v7x) add a K-split grid axis that
        # streams w1^T in (tk, Dp) blocks into an f32 VMEM accumulator instead of keeping the
        # whole weight resident.
        return pl.pallas_call(
            kernel,
            grid=grid,
            in_specs=[
                pl.BlockSpec((TB, TT, Dp), lambda i: (i, 0, 0)),   # streamed activations
                resident((Dp, Dp)),                                # w1^T  (VMEM-resident)
                resident((1, Dp)),                                 # b1
                resident((1, Dp)),                                 # gamma
                resident((1, Dp)),                                 # beta
                resident((T, Dp)),                                 # wout
                resident((1, T)),                                  # bout
            ],
            out_specs=out_spec,
            out_shape=out_shape,
            compiler_params=pltpu.CompilerParams(
                dimension_semantics=("parallel",),
                vmem_limit_bytes=vmem_limit,
            ),
        )

    args = (x, w1t, b1.reshape(1, Dp), gamma.reshape(1, Dp), beta.reshape(1, Dp),
            wout, bout.reshape(1, T))
    try:
        out_raw = build(True)(*args)
    except Exception:
        # Older JAX without BlockSpec(pipeline_mode=...): default double-buffered params.
        out_raw = build(False)(*args)

    return out_raw.T if transpose_out else out_raw   # cheap XLA transpose -> [B, d_out]


def _reference(x, w1, b1, gamma, beta, wout, bout, *, cls=True):
    if cls:
        x = x[:, :-1, :]
    y = jnp.einsum("btd,od->bto", x, w1) + b1
    mean = jnp.mean(y, axis=-1, keepdims=True)
    var = jnp.mean((y - mean) ** 2, axis=-1, keepdims=True)
    h = (y - mean) / jnp.sqrt(var + _LN_EPS) * gamma + beta
    h = jnp.maximum(h, 0.0)
    return jnp.einsum("btd,td->bt", h, wout) + bout


if __name__ == "__main__":
    key = jax.random.PRNGKey(0)
    kx, kw1, kb1, kg, kbt, kwo, kbo = jax.random.split(key, 7)

    # Two small configs: d_out % 8 == 0 (CLS dropped via the token block) and
    # d_out % 8 != 0 (full-S block, CLS row sliced in-kernel).
    for (B, d_in, d_out) in [(8, 32, 8), (8, 32, 7)]:
        S = d_out + 1                                            # cls=True -> one extra token
        x = jax.random.normal(kx, (B, S, d_in), dtype=jnp.float32)
        # nn.Linear(d_in, d_in) params (PyTorch [out, in] layout)
        w1 = jax.random.normal(kw1, (d_in, d_in), dtype=jnp.float32) * 0.1
        b1 = jax.random.normal(kb1, (d_in,), dtype=jnp.float32) * 0.1
        # nn.LayerNorm(d_in) params
        gamma = 1.0 + 0.1 * jax.random.normal(kg, (d_in,), dtype=jnp.float32)
        beta = 0.1 * jax.random.normal(kbt, (d_in,), dtype=jnp.float32)
        # d_out independent nn.Linear(d_in, 1) heads packed as [d_out, d_in] / [d_out]
        wout = jax.random.normal(kwo, (d_out, d_in), dtype=jnp.float32) * 0.1
        bout = jax.random.normal(kbo, (d_out,), dtype=jnp.float32) * 0.1

        out = jax.block_until_ready(
            reconstruction_head(x, w1, b1, gamma, beta, wout, bout, cls=True))
        ref = _reference(x, w1, b1, gamma, beta, wout, bout, cls=True)
        np.testing.assert_allclose(np.asarray(out), np.asarray(ref),
                                   rtol=1e-4, atol=1e-4)

    print("KERNEL_OK")
</pallas_src>

<mosaic_0001>
module attributes {stable_mosaic.version = 11 : i64} {
  func.func @_recon_head_kernel(%arg0: i32, %arg1: memref<8x8x128xf32, #tpu.memory_space<vmem>>, %arg2: memref<128x128xf32, #tpu.memory_space<vmem>>, %arg3: memref<1x128xf32, #tpu.memory_space<vmem>>, %arg4: memref<1x128xf32, #tpu.memory_space<vmem>>, %arg5: memref<1x128xf32, #tpu.memory_space<vmem>>, %arg6: memref<8x128xf32, #tpu.memory_space<vmem>>, %arg7: memref<1x8xf32, #tpu.memory_space<vmem>>, %arg8: memref<8x8xf32, #tpu.memory_space<vmem>>) attributes {dimension_semantics = [#tpu.dimension_semantics<parallel>], iteration_bounds = array<i64: 1>, scalar_prefetch = 0 : i64, scratch_operands = 0 : i64, tpu.core_type = #tpu.core_type<tc>, window_params = [{transform_indices = @transform_0, window_bounds = array<i64: 8, 8, 128>}, {pipeline_mode = #tpu.pipeline_mode<synchronous>, transform_indices = @transform_1, window_bounds = array<i64: 128, 128>}, {pipeline_mode = #tpu.pipeline_mode<synchronous>, transform_indices = @transform_2, window_bounds = array<i64: 1, 128>}, {pipeline_mode = #tpu.pipeline_mode<synchronous>, transform_indices = @transform_3, window_bounds = array<i64: 1, 128>}, {pipeline_mode = #tpu.pipeline_mode<synchronous>, transform_indices = @transform_4, window_bounds = array<i64: 1, 128>}, {pipeline_mode = #tpu.pipeline_mode<synchronous>, transform_indices = @transform_5, window_bounds = array<i64: 8, 128>}, {pipeline_mode = #tpu.pipeline_mode<synchronous>, transform_indices = @transform_6, window_bounds = array<i64: 1, 8>}, {transform_indices = @transform_7, window_bounds = array<i64: 8, 8>}]} {
    %c0 = arith.constant 0 : index
    %c0_0 = arith.constant 0 : index
    %c0_1 = arith.constant 0 : index
    %0 = vector.load %arg1[%c0, %c0_0, %c0_1] : memref<8x8x128xf32, #tpu.memory_space<vmem>>, vector<8x8x128xf32>
    %1 = vector.shape_cast %0 : vector<8x8x128xf32> to vector<64x128xf32>
    %c0_2 = arith.constant 0 : index
    %c0_3 = arith.constant 0 : index
    %2 = vector.load %arg2[%c0_2, %c0_3] : memref<128x128xf32, #tpu.memory_space<vmem>>, vector<128x128xf32>
    %cst = arith.constant dense<0.000000e+00> : vector<64x128xf32>
    %3 = tpu.matmul %1, %2, %cst {dimension_numbers = #tpu.dot_dimension_numbers<[1], [0], [0], [1], [0, 0, 1, 1], [], []>} : vector<64x128xf32>, vector<128x128xf32>, vector<64x128xf32> -> vector<64x128xf32>
    %c0_4 = arith.constant 0 : index
    %c0_5 = arith.constant 0 : index
    %4 = vector.load %arg3[%c0_4, %c0_5] : memref<1x128xf32, #tpu.memory_space<vmem>>, vector<1x128xf32>
    %5 = vector.broadcast %4 : vector<1x128xf32> to vector<64x128xf32>
    %6 = arith.addf %3, %5 : vector<64x128xf32>
    %cst_6 = arith.constant dense<0.000000e+00> : vector<64xf32>
    %7 = vector.multi_reduction <add>, %6, %cst_6 [1] : vector<64x128xf32> to vector<64xf32>
    %8 = vector.shape_cast %7 : vector<64xf32> to vector<64x1xf32>
    %cst_7 = arith.constant 3.125000e-02 : f32
    %9 = vector.broadcast %cst_7 : f32 to vector<64x1xf32>
    %10 = arith.mulf %8, %9 : vector<64x1xf32>
    %11 = vector.broadcast %10 : vector<64x1xf32> to vector<64x128xf32>
    %12 = arith.subf %6, %11 : vector<64x128xf32>
    %13 = tpu.iota {dimensions = array<i32: 1>} : vector<1x128xi32>
    %c32_i32 = arith.constant 32 : i32
    %14 = vector.broadcast %c32_i32 : i32 to vector<1x128xi32>
    %15 = arith.cmpi slt, %13, %14 : vector<1x128xi32>
    %cst_8 = arith.constant 0.000000e+00 : f32
    %16 = vector.shape_cast %15 : vector<1x128xi1> to vector<1x128xi1>
    %17 = vector.broadcast %16 : vector<1x128xi1> to vector<64x128xi1>
    %18 = vector.broadcast %cst_8 : f32 to vector<64x128xf32>
    %19 = arith.select %17, %12, %18 : vector<64x128xi1>, vector<64x128xf32>
    %20 = arith.mulf %19, %19 : vector<64x128xf32>
    %cst_9 = arith.constant dense<0.000000e+00> : vector<64xf32>
    %21 = vector.multi_reduction <add>, %20, %cst_9 [1] : vector<64x128xf32> to vector<64xf32>
    %22 = vector.shape_cast %21 : vector<64xf32> to vector<64x1xf32>
    %cst_10 = arith.constant 3.125000e-02 : f32
    %23 = vector.broadcast %cst_10 : f32 to vector<64x1xf32>
    %24 = arith.mulf %22, %23 : vector<64x1xf32>
    %c0_11 = arith.constant 0 : index
    %c0_12 = arith.constant 0 : index
    %25 = vector.load %arg4[%c0_11, %c0_12] : memref<1x128xf32, #tpu.memory_space<vmem>>, vector<1x128xf32>
    %cst_13 = arith.constant 9.99999974E-6 : f32
    %26 = vector.broadcast %cst_13 : f32 to vector<64x1xf32>
    %27 = arith.addf %24, %26 : vector<64x1xf32>
    %28 = math.rsqrt %27 : vector<64x1xf32>
    %29 = vector.broadcast %25 : vector<1x128xf32> to vector<64x128xf32>
    %30 = vector.broadcast %28 : vector<64x1xf32> to vector<64x128xf32>
    %31 = arith.mulf %29, %30 : vector<64x128xf32>
    %c0_14 = arith.constant 0 : index
    %c0_15 = arith.constant 0 : index
    %32 = vector.load %arg5[%c0_14, %c0_15] : memref<1x128xf32, #tpu.memory_space<vmem>>, vector<1x128xf32>
    %33 = vector.broadcast %10 : vector<64x1xf32> to vector<64x128xf32>
    %34 = arith.mulf %33, %31 : vector<64x128xf32>
    %35 = vector.broadcast %32 : vector<1x128xf32> to vector<64x128xf32>
    %36 = arith.subf %35, %34 : vector<64x128xf32>
    %37 = arith.mulf %6, %31 : vector<64x128xf32>
    %38 = arith.addf %37, %36 : vector<64x128xf32>
    %cst_16 = arith.constant 0.000000e+00 : f32
    %39 = vector.broadcast %cst_16 : f32 to vector<64x128xf32>
    %40 = arith.maximumf %38, %39 : vector<64x128xf32>
    %41 = vector.shape_cast %40 : vector<64x128xf32> to vector<8x8x128xf32>
    %c0_17 = arith.constant 0 : index
    %c0_18 = arith.constant 0 : index
    %42 = vector.load %arg6[%c0_17, %c0_18] : memref<8x128xf32, #tpu.memory_space<vmem>>, vector<8x128xf32>
    %43 = vector.shape_cast %42 : vector<8x128xf32> to vector<1x8x128xf32>
    %44 = vector.broadcast %43 : vector<1x8x128xf32> to vector<8x8x128xf32>
    %45 = arith.mulf %41, %44 : vector<8x8x128xf32>
    %cst_19 = arith.constant dense<0.000000e+00> : vector<8x8xf32>
    %46 = vector.multi_reduction <add>, %45, %cst_19 [2] : vector<8x8x128xf32> to vector<8x8xf32>
    %c0_20 = arith.constant 0 : index
    %c0_21 = arith.constant 0 : index
    %47 = vector.load %arg7[%c0_20, %c0_21] : memref<1x8xf32, #tpu.memory_space<vmem>>, vector<1x8xf32>
    %48 = vector.broadcast %47 : vector<1x8xf32> to vector<8x8xf32>
    %49 = arith.addf %46, %48 : vector<8x8xf32>
    %50 = tpu.transpose %49, [1, 0] : vector<8x8xf32> -> vector<8x8xf32>
    %c0_22 = arith.constant 0 : index
    %c0_23 = arith.constant 0 : index
    %51 = vector.load %arg8[%c0_22, %c0_23] : memref<8x8xf32, #tpu.memory_space<vmem>>, vector<8x8xf32>
    tpu.vector_store %arg8[%c0_22, %c0_23], %50 {strides = array<i32>} : memref<8x8xf32, #tpu.memory_space<vmem>>, vector<8x8xf32>,
    return
  }
  func.func @transform_0(%arg0: i32) -> (i32, i32, i32) {
    %c0_i32 = arith.constant 0 : i32
    %c0_i32_0 = arith.constant 0 : i32
    %c0_i32_1 = arith.constant 0 : i32
    return %arg0, %c0_i32, %c0_i32_0 : i32, i32, i32
  }
  func.func @transform_1(%arg0: i32) -> (i32, i32) {
    %c0_i32 = arith.constant 0 : i32
    %c0_i32_0 = arith.constant 0 : i32
    %c0_i32_1 = arith.constant 0 : i32
    return %c0_i32, %c0_i32_0 : i32, i32
  }
  func.func @transform_2(%arg0: i32) -> (i32, i32) {
    %c0_i32 = arith.constant 0 : i32
    %c0_i32_0 = arith.constant 0 : i32
    %c0_i32_1 = arith.constant 0 : i32
    return %c0_i32, %c0_i32_0 : i32, i32
  }
  func.func @transform_3(%arg0: i32) -> (i32, i32) {
    %c0_i32 = arith.constant 0 : i32
    %c0_i32_0 = arith.constant 0 : i32
    %c0_i32_1 = arith.constant 0 : i32
    return %c0_i32, %c0_i32_0 : i32, i32
  }
  func.func @transform_4(%arg0: i32) -> (i32, i32) {
    %c0_i32 = arith.constant 0 : i32
    %c0_i32_0 = arith.constant 0 : i32
    %c0_i32_1 = arith.constant 0 : i32
    return %c0_i32, %c0_i32_0 : i32, i32
  }
  func.func @transform_5(%arg0: i32) -> (i32, i32) {
    %c0_i32 = arith.constant 0 : i32
    %c0_i32_0 = arith.constant 0 : i32
    %c0_i32_1 = arith.constant 0 : i32
    return %c0_i32, %c0_i32_0 : i32, i32
  }
  func.func @transform_6(%arg0: i32) -> (i32, i32) {
    %c0_i32 = arith.constant 0 : i32
    %c0_i32_0 = arith.constant 0 : i32
    %c0_i32_1 = arith.constant 0 : i32
    return %c0_i32, %c0_i32_0 : i32, i32
  }
  func.func @transform_7(%arg0: i32) -> (i32, i32) {
    %c0_i32 = arith.constant 0 : i32
    %c0_i32_0 = arith.constant 0 : i32
    return %c0_i32, %arg0 : i32, i32
  }
}

module attributes {stable_mosaic.version = 11 : i64} {
  func.func @_recon_head_kernel(%arg0: i32, %arg1: memref<8x8x128xf32, #tpu.memory_space<vmem>>, %arg2: memref<128x128xf32, #tpu.memory_space<vmem>>, %arg3: memref<1x128xf32, #tpu.memory_space<vmem>>, %arg4: memref<1x128xf32, #tpu.memory_space<vmem>>, %arg5: memref<1x128xf32, #tpu.memory_space<vmem>>, %arg6: memref<8x128xf32, #tpu.memory_space<vmem>>, %arg7: memref<1x8xf32, #tpu.memory_space<vmem>>, %arg8: memref<8x8xf32, #tpu.memory_space<vmem>>) attributes {dimension_semantics = [#tpu.dimension_semantics<parallel>], iteration_bounds = array<i64: 1>, scalar_prefetch = 0 : i64, scratch_operands = 0 : i64, tpu.core_type = #tpu.core_type<tc>, window_params = [{transform_indices = @transform_0, window_bounds = array<i64: 8, 8, 128>}, {pipeline_mode = #tpu.pipeline_mode<synchronous>, transform_indices = @transform_1, window_bounds = array<i64: 128, 128>}, {pipeline_mode = #tpu.pipeline_mode<synchronous>, transform_indices = @transform_2, window_bounds = array<i64: 1, 128>}, {pipeline_mode = #tpu.pipeline_mode<synchronous>, transform_indices = @transform_3, window_bounds = array<i64: 1, 128>}, {pipeline_mode = #tpu.pipeline_mode<synchronous>, transform_indices = @transform_4, window_bounds = array<i64: 1, 128>}, {pipeline_mode = #tpu.pipeline_mode<synchronous>, transform_indices = @transform_5, window_bounds = array<i64: 8, 128>}, {pipeline_mode = #tpu.pipeline_mode<synchronous>, transform_indices = @transform_6, window_bounds = array<i64: 1, 8>}, {transform_indices = @transform_7, window_bounds = array<i64: 8, 8>}]} {
    %c0 = arith.constant 0 : index
    %c0_0 = arith.constant 0 : index
    %c0_1 = arith.constant 0 : index
    %0 = vector.load %arg1[%c0, %c0_0, %c0_1] : memref<8x8x128xf32, #tpu.memory_space<vmem>>, vector<8x8x128xf32>
    %1 = vector.shape_cast %0 : vector<8x8x128xf32> to vector<64x128xf32>
    %c0_2 = arith.constant 0 : index
    %c0_3 = arith.constant 0 : index
    %2 = vector.load %arg2[%c0_2, %c0_3] : memref<128x128xf32, #tpu.memory_space<vmem>>, vector<128x128xf32>
    %cst = arith.constant dense<0.000000e+00> : vector<64x128xf32>
    %3 = tpu.matmul %1, %2, %cst {dimension_numbers = #tpu.dot_dimension_numbers<[1], [0], [0], [1], [0, 0, 1, 1], [], []>} : vector<64x128xf32>, vector<128x128xf32>, vector<64x128xf32> -> vector<64x128xf32>
    %c0_4 = arith.constant 0 : index
    %c0_5 = arith.constant 0 : index
    %4 = vector.load %arg3[%c0_4, %c0_5] : memref<1x128xf32, #tpu.memory_space<vmem>>, vector<1x128xf32>
    %5 = vector.broadcast %4 : vector<1x128xf32> to vector<64x128xf32>
    %6 = arith.addf %3, %5 : vector<64x128xf32>
    %cst_6 = arith.constant dense<0.000000e+00> : vector<64xf32>
    %7 = vector.multi_reduction <add>, %6, %cst_6 [1] : vector<64x128xf32> to vector<64xf32>
    %8 = vector.shape_cast %7 : vector<64xf32> to vector<64x1xf32>
    %cst_7 = arith.constant 3.125000e-02 : f32
    %9 = vector.broadcast %cst_7 : f32 to vector<64x1xf32>
    %10 = arith.mulf %8, %9 : vector<64x1xf32>
    %11 = vector.broadcast %10 : vector<64x1xf32> to vector<64x128xf32>
    %12 = arith.subf %6, %11 : vector<64x128xf32>
    %13 = tpu.iota {dimensions = array<i32: 1>} : vector<1x128xi32>
    %c32_i32 = arith.constant 32 : i32
    %14 = vector.broadcast %c32_i32 : i32 to vector<1x128xi32>
    %15 = arith.cmpi slt, %13, %14 : vector<1x128xi32>
    %cst_8 = arith.constant 0.000000e+00 : f32
    %16 = vector.shape_cast %15 : vector<1x128xi1> to vector<1x128xi1>
    %17 = vector.broadcast %16 : vector<1x128xi1> to vector<64x128xi1>
    %18 = vector.broadcast %cst_8 : f32 to vector<64x128xf32>
    %19 = arith.select %17, %12, %18 : vector<64x128xi1>, vector<64x128xf32>
    %20 = arith.mulf %19, %19 : vector<64x128xf32>
    %cst_9 = arith.constant dense<0.000000e+00> : vector<64xf32>
    %21 = vector.multi_reduction <add>, %20, %cst_9 [1] : vector<64x128xf32> to vector<64xf32>
    %22 = vector.shape_cast %21 : vector<64xf32> to vector<64x1xf32>
    %cst_10 = arith.constant 3.125000e-02 : f32
    %23 = vector.broadcast %cst_10 : f32 to vector<64x1xf32>
    %24 = arith.mulf %22, %23 : vector<64x1xf32>
    %c0_11 = arith.constant 0 : index
    %c0_12 = arith.constant 0 : index
    %25 = vector.load %arg4[%c0_11, %c0_12] : memref<1x128xf32, #tpu.memory_space<vmem>>, vector<1x128xf32>
    %cst_13 = arith.constant 9.99999974E-6 : f32
    %26 = vector.broadcast %cst_13 : f32 to vector<64x1xf32>
    %27 = arith.addf %24, %26 : vector<64x1xf32>
    %28 = math.rsqrt %27 : vector<64x1xf32>
    %29 = vector.broadcast %25 : vector<1x128xf32> to vector<64x128xf32>
    %30 = vector.broadcast %28 : vector<64x1xf32> to vector<64x128xf32>
    %31 = arith.mulf %29, %30 : vector<64x128xf32>
    %c0_14 = arith.constant 0 : index
    %c0_15 = arith.constant 0 : index
    %32 = vector.load %arg5[%c0_14, %c0_15] : memref<1x128xf32, #tpu.memory_space<vmem>>, vector<1x128xf32>
    %33 = vector.broadcast %10 : vector<64x1xf32> to vector<64x128xf32>
    %34 = arith.mulf %33, %31 : vector<64x128xf32>
    %35 = vector.broadcast %32 : vector<1x128xf32> to vector<64x128xf32>
    %36 = arith.subf %35, %34 : vector<64x128xf32>
    %37 = arith.mulf %6, %31 : vector<64x128xf32>
    %38 = arith.addf %37, %36 : vector<64x128xf32>
    %cst_16 = arith.constant 0.000000e+00 : f32
    %39 = vector.broadcast %cst_16 : f32 to vector<64x128xf32>
    %40 = arith.maximumf %38, %39 : vector<64x128xf32>
    %41 = vector.shape_cast %40 : vector<64x128xf32> to vector<8x8x128xf32>
    %c0_17 = arith.constant 0 : index
    %c0_18 = arith.constant 0 : index
    %42 = vector.load %arg6[%c0_17, %c0_18] : memref<8x128xf32, #tpu.memory_space<vmem>>, vector<8x128xf32>
    %43 = vector.shape_cast %42 : vector<8x128xf32> to vector<1x8x128xf32>
    %44 = vector.broadcast %43 : vector<1x8x128xf32> to vector<8x8x128xf32>
    %45 = arith.mulf %41, %44 : vector<8x8x128xf32>
    %cst_19 = arith.constant dense<0.000000e+00> : vector<8x8xf32>
    %46 = vector.multi_reduction <add>, %45, %cst_19 [2] : vector<8x8x128xf32> to vector<8x8xf32>
    %c0_20 = arith.constant 0 : index
    %c0_21 = arith.constant 0 : index
    %47 = vector.load %arg7[%c0_20, %c0_21] : memref<1x8xf32, #tpu.memory_space<vmem>>, vector<1x8xf32>
    %48 = vector.broadcast %47 : vector<1x8xf32> to vector<8x8xf32>
    %49 = arith.addf %46, %48 : vector<8x8xf32>
    %50 = tpu.transpose %49, [1, 0] : vector<8x8xf32> -> vector<8x8xf32>
    %c0_22 = arith.constant 0 : index
    %c0_23 = arith.constant 0 : index
    %51 = vector.load %arg8[%c0_22, %c0_23] : memref<8x8xf32, #tpu.memory_space<vmem>>, vector<8x8xf32>
    tpu.vector_store %arg8[%c0_22, %c0_23], %50 {strides = array<i32>} : memref<8x8xf32, #tpu.memory_space<vmem>>, vector<8x8xf32>,
    return
  }
  func.func @transform_0(%arg0: i32) -> (i32, i32, i32) {
    %c0_i32 = arith.constant 0 : i32
    %c0_i32_0 = arith.constant 0 : i32
    %c0_i32_1 = arith.constant 0 : i32
    return %arg0, %c0_i32, %c0_i32_0 : i32, i32, i32
  }
  func.func @transform_1(%arg0: i32) -> (i32, i32) {
    %c0_i32 = arith.constant 0 : i32
    %c0_i32_0 = arith.constant 0 : i32
    %c0_i32_1 = arith.constant 0 : i32
    return %c0_i32, %c0_i32_0 : i32, i32
  }
  func.func @transform_2(%arg0: i32) -> (i32, i32) {
    %c0_i32 = arith.constant 0 : i32
    %c0_i32_0 = arith.constant 0 : i32
    %c0_i32_1 = arith.constant 0 : i32
    return %c0_i32, %c0_i32_0 : i32, i32
  }
  func.func @transform_3(%arg0: i32) -> (i32, i32) {
    %c0_i32 = arith.constant 0 : i32
    %c0_i32_0 = arith.constant 0 : i32
    %c0_i32_1 = arith.constant 0 : i32
    return %c0_i32, %c0_i32_0 : i32, i32
  }
  func.func @transform_4(%arg0: i32) -> (i32, i32) {
    %c0_i32 = arith.constant 0 : i32
    %c0_i32_0 = arith.constant 0 : i32
    %c0_i32_1 = arith.constant 0 : i32
    return %c0_i32, %c0_i32_0 : i32, i32
  }
  func.func @transform_5(%arg0: i32) -> (i32, i32) {
    %c0_i32 = arith.constant 0 : i32
    %c0_i32_0 = arith.constant 0 : i32
    %c0_i32_1 = arith.constant 0 : i32
    return %c0_i32, %c0_i32_0 : i32, i32
  }
  func.func @transform_6(%arg0: i32) -> (i32, i32) {
    %c0_i32 = arith.constant 0 : i32
    %c0_i32_0 = arith.constant 0 : i32
    %c0_i32_1 = arith.constant 0 : i32
    return %c0_i32, %c0_i32_0 : i32, i32
  }
  func.func @transform_7(%arg0: i32) -> (i32, i32) {
    %c0_i32 = arith.constant 0 : i32
    %c0_i32_0 = arith.constant 0 : i32
    return %c0_i32, %arg0 : i32, i32
  }
}

</mosaic_0001>

<llo_original>
// kernel: tpu_custom_call.1
$region0: #{tpu_custom_call.1}
  #allocation0 [shape = 'u32[]', space=smem, size = 0x4, offset = 0x4, fixed_abs, tag = 'smem constant byte address 0x4 - core index']
  #allocation1 [shape = 'u32[72,128]{1,0:T(1,128)}', space=vmem, size = 0x9000, scoped, tag = 'internal scratch']
  %s0 = inlined_call_operand.vmem [shape: f32[8,9,128], index: 0, kind: input, shape index: {}]
  %s1 = inlined_call_operand.vmem [shape: f32[128,128], index: 1, kind: input, shape index: {}]
  %s2 = inlined_call_operand.vmem [shape: f32[1,128], index: 2, kind: input, shape index: {}]
  %s3 = inlined_call_operand.vmem [shape: f32[1,128], index: 3, kind: input, shape index: {}]
  %s4 = inlined_call_operand.vmem [shape: f32[1,128], index: 4, kind: input, shape index: {}]
  %s5 = inlined_call_operand.vmem [shape: f32[8,128], index: 5, kind: input, shape index: {}]
  %s6 = inlined_call_operand.vmem [shape: f32[1,8], index: 6, kind: input, shape index: {}]
  %s7 = inlined_call_operand.hbm [shape: f32[8,8], index: 7, kind: output, shape index: {}]
  %s8 = sld [smem:[#allocation0]]
  $region76: #{tpu_custom_call.1} parent=0
    _
  %s10 = ssub.s32 1, %s8
  %s11 = scalar_select 0, %s10, %s8
  $region1: #{tpu_custom_call.1} parent=0
    #allocation2 [shape = 'u8[32768]{0}', space=vmem, size = 0x8000, scoped, tag = 'input window, operand 0, single buffered']
    #allocation3 [shape = 'u8[4096]{0}', space=vmem, size = 0x1000, scoped, tag = 'output window, operand 0, single buffered']
    #allocation4 [shape = 's32[1]{0}', space=sflag, size = 0x4, scoped, tag = 'scoped memory for tpu_custom_call.1']
    %12 = vsyncpa [#allocation4], 0
    // Predicated region
    $region2: #{tpu_custom_call.1} parent=1 // pred_check
      _
    $region3: #{tpu_custom_call.1} parent=1 // pred_check_branch
      %14 = sbr.rel (0) target = $region5
    $region4: #{tpu_custom_call.1} parent=1 // pred_region
      // Predicated region
      $region6: #{tpu_custom_call.1} parent=4 // pred_check
        _
      $region7: #{tpu_custom_call.1} parent=4 // pred_check_branch
        %16 = sbr.rel (0) target = $region9
      $region8: #{tpu_custom_call.1} parent=4 // pred_region
        // Predicated region
        $region10: #{tpu_custom_call.1} parent=8 // pred_check
          _
        $region11: #{tpu_custom_call.1} parent=8 // pred_check_branch
          %18 = sbr.rel (0) target = $region13
        $region12: #{tpu_custom_call.1} parent=8 // pred_region
          // Predicated region
          $region25: #{tpu_custom_call.1} parent=12 // pred_check
            _
          $region26: #{tpu_custom_call.1} parent=12 // pred_check_branch
            %48 = sbr.rel (0) target = $region28
          $region27: #{tpu_custom_call.1} parent=12 // pred_region
            loop: start=0, step=1, limit=1
            $region29: #{tpu_custom_call.1} parent=27 // loop_pre_header
              _
            $region30: #{tpu_custom_call.1} parent=27 // loop_header
              %s50 = sphi 0, %s54
              %p51 = scmp.ge.s32.totalorder %s50, 1
              %s55 = sphi %s0, %s0
              %s56 = sphi [#allocation2], [#allocation2]
            $region31: #{tpu_custom_call.1} parent=27 // loop_header_branch
              %53 = sbr.rel (%p51) target = $region35
            $region32: #{tpu_custom_call.1} parent=27 // loop_body
              %v57 = vld [vmem:[%s55] sm:$0xff]
              %58 = vst [vmem:[%s56] sm:$0xff] %v57
              %v59 = vld [vmem:[%s55 + $0x10] sm:$0xff]
              %60 = vst [vmem:[%s56 + $0x8] sm:$0xff] %v59
              %v61 = vld [vmem:[%s55 + $0x20] sm:$0xff]
              %62 = vst [vmem:[%s56 + $0x10] sm:$0xff] %v61
              %v63 = vld [vmem:[%s55 + $0x30] sm:$0xff]
              %64 = vst [vmem:[%s56 + $0x18] sm:$0xff] %v63
              %v65 = vld [vmem:[%s55 + $0x40] sm:$0xff]
              %66 = vst [vmem:[%s56 + $0x20] sm:$0xff] %v65
              %v67 = vld [vmem:[%s55 + $0x50] sm:$0xff]
              %68 = vst [vmem:[%s56 + $0x28] sm:$0xff] %v67
              %v69 = vld [vmem:[%s55 + $0x60] sm:$0xff]
              %70 = vst [vmem:[%s56 + $0x30] sm:$0xff] %v69
              %v71 = vld [vmem:[%s55 + $0x70] sm:$0xff]
              %72 = vst [vmem:[%s56 + $0x38] sm:$0xff] %v71
            $region33: #{tpu_custom_call.1} parent=27 // loop_footer
              %s54 = sadd.s32 1, %s50
            $region34: #{tpu_custom_call.1} parent=27 // loop_footer_branch
              %49 = sbr.rel target = $region30
            $region35: #{tpu_custom_call.1} parent=27 // loop_exit
              _
          $region28: #{tpu_custom_call.1} parent=12 // pred_fallthru
            _
          // Predicated region
          $region36: #{tpu_custom_call.1} parent=12 // pred_check
            _
          $region37: #{tpu_custom_call.1} parent=12 // pred_check_branch
            %74 = sbr.rel target = $region39
          $region38: #{tpu_custom_call.1} parent=12 // pred_region
            _
          $region39: #{tpu_custom_call.1} parent=12 // pred_fallthru
            _
        $region13: #{tpu_custom_call.1} parent=8 // pred_fallthru
          _
        // Predicated region
        $region14: #{tpu_custom_call.1} parent=8 // pred_check
          _
        $region15: #{tpu_custom_call.1} parent=8 // pred_check_branch
          %20 = sbr.rel target = $region17
        $region16: #{tpu_custom_call.1} parent=8 // pred_region
          %s22 = ssub.s32 256, 1
          loop: start=0, step=1, limit=1
          $region18: #{tpu_custom_call.1} parent=16 // loop_pre_header
            _
          $region19: #{tpu_custom_call.1} parent=16 // loop_header
            %s24 = sphi 0, %s28
            %p25 = scmp.ge.s32.totalorder %s24, 1
            %s29 = sphi %s0, %s0
            %s30 = sphi [#allocation2], [#allocation2]
          $region20: #{tpu_custom_call.1} parent=16 // loop_header_branch
            %27 = sbr.rel (%p25) target = $region24
          $region21: #{tpu_custom_call.1} parent=16 // loop_body
            %v31 = vld [vmem:[%s29] sm:%s22]
            %32 = vst [vmem:[%s30] sm:%s22] %v31
            %v33 = vld [vmem:[%s29 + $0x10] sm:%s22]
            %34 = vst [vmem:[%s30 + $0x8] sm:%s22] %v33
            %v35 = vld [vmem:[%s29 + $0x20] sm:%s22]
            %36 = vst [vmem:[%s30 + $0x10] sm:%s22] %v35
            %v37 = vld [vmem:[%s29 + $0x30] sm:%s22]
            %38 = vst [vmem:[%s30 + $0x18] sm:%s22] %v37
            %v39 = vld [vmem:[%s29 + $0x40] sm:%s22]
            %40 = vst [vmem:[%s30 + $0x20] sm:%s22] %v39
            %v41 = vld [vmem:[%s29 + $0x50] sm:%s22]
            %42 = vst [vmem:[%s30 + $0x28] sm:%s22] %v41
            %v43 = vld [vmem:[%s29 + $0x60] sm:%s22]
            %44 = vst [vmem:[%s30 + $0x30] sm:%s22] %v43
            %v45 = vld [vmem:[%s29 + $0x70] sm:%s22]
            %46 = vst [vmem:[%s30 + $0x38] sm:%s22] %v45
          $region22: #{tpu_custom_call.1} parent=16 // loop_footer
            %s28 = sadd.s32 1, %s24
          $region23: #{tpu_custom_call.1} parent=16 // loop_footer_branch
            %23 = sbr.rel target = $region19
          $region24: #{tpu_custom_call.1} parent=16 // loop_exit
            _
        $region17: #{tpu_custom_call.1} parent=8 // pred_fallthru
          _
      $region9: #{tpu_custom_call.1} parent=4 // pred_fallthru
        _
      %75 = vnop
    $region5: #{tpu_custom_call.1} parent=1 // pred_fallthru
      _
    // Predicated region
    $region40: #{tpu_custom_call.1} parent=1 // pred_check
      _
    $region41: #{tpu_custom_call.1} parent=1 // pred_check_branch
      %77 = sbr.rel (0) target = $region43
    $region42: #{tpu_custom_call.1} parent=1 // pred_region
      _
    $region43: #{tpu_custom_call.1} parent=1 // pred_fallthru
      _
    // Predicated region
    $region44: #{tpu_custom_call.1} parent=1 // pred_check
      _
    $region45: #{tpu_custom_call.1} parent=1 // pred_check_branch
      %79 = sbr.rel (0) target = $region47
    $region46: #{tpu_custom_call.1} parent=1 // pred_region
      _
    $region47: #{tpu_custom_call.1} parent=1 // pred_fallthru
      _
    // Predicated region
    $region48: #{tpu_custom_call.1} parent=1 // pred_check
      _
    $region49: #{tpu_custom_call.1} parent=1 // pred_check_branch
      %81 = sbr.rel (0) target = $region51
    $region50: #{tpu_custom_call.1} parent=1 // pred_region
      _
    $region51: #{tpu_custom_call.1} parent=1 // pred_fallthru
      _
    // Predicated region
    $region52: #{tpu_custom_call.1} parent=1 // pred_check
      _
    $region53: #{tpu_custom_call.1} parent=1 // pred_check_branch
      %83 = sbr.rel (0) target = $region55
    $region54: #{tpu_custom_call.1} parent=1 // pred_region
      _
    $region55: #{tpu_custom_call.1} parent=1 // pred_fallthru
      _
    // Predicated region
    $region56: #{tpu_custom_call.1} parent=1 // pred_check
      _
    $region57: #{tpu_custom_call.1} parent=1 // pred_check_branch
      %85 = sbr.rel (0) target = $region59
    $region58: #{tpu_custom_call.1} parent=1 // pred_region
      _
    $region59: #{tpu_custom_call.1} parent=1 // pred_fallthru
      _
    // Predicated region
    $region60: #{tpu_custom_call.1} parent=1 // pred_check
      _
    $region61: #{tpu_custom_call.1} parent=1 // pred_check_branch
      %87 = sbr.rel (0) target = $region63
    $region62: #{tpu_custom_call.1} parent=1 // pred_region
      _
    $region63: #{tpu_custom_call.1} parent=1 // pred_fallthru
      _
    // Predicated region
    $region64: #{tpu_custom_call.1} parent=1 // pred_check
      _
    $region65: #{tpu_custom_call.1} parent=1 // pred_check_branch
      %89 = sbr.rel (0) target = $region67
    $region66: #{tpu_custom_call.1} parent=1 // pred_region
      _
    $region67: #{tpu_custom_call.1} parent=1 // pred_fallthru
      _
    %v90 = vld [vmem:[#allocation2] sm:$0xff]
    %v91 = vld [vmem:[#allocation2 + $0x8] sm:$0xff]
    %v92 = vld [vmem:[#allocation2 + $0x10] sm:$0xff]
    %v93 = vld [vmem:[#allocation2 + $0x18] sm:$0xff]
    %v94 = vld [vmem:[#allocation2 + $0x20] sm:$0xff]
    %v95 = vld [vmem:[#allocation2 + $0x28] sm:$0xff]
    %v96 = vld [vmem:[#allocation2 + $0x30] sm:$0xff]
    %v97 = vld [vmem:[#allocation2 + $0x38] sm:$0xff]
    %v98 = vld [vmem:[%s1] sm:$0xff]
    %v99 = vld [vmem:[%s1 + $0x8] sm:$0xff]
    %v100 = vld [vmem:[%s1 + $0x10] sm:$0xff]
    %v101 = vld [vmem:[%s1 + $0x18] sm:$0xff]
    %v102 = vld [vmem:[%s1 + $0x20] sm:$0xff]
    %v103 = vld [vmem:[%s1 + $0x28] sm:$0xff]
    %v104 = vld [vmem:[%s1 + $0x30] sm:$0xff]
    %v105 = vld [vmem:[%s1 + $0x38] sm:$0xff]
    %v106 = vld [vmem:[%s1 + $0x40] sm:$0xff]
    %v107 = vld [vmem:[%s1 + $0x48] sm:$0xff]
    %v108 = vld [vmem:[%s1 + $0x50] sm:$0xff]
    %v109 = vld [vmem:[%s1 + $0x58] sm:$0xff]
    %v110 = vld [vmem:[%s1 + $0x60] sm:$0xff]
    %v111 = vld [vmem:[%s1 + $0x68] sm:$0xff]
    %v112 = vld [vmem:[%s1 + $0x70] sm:$0xff]
    %v113 = vld [vmem:[%s1 + $0x78] sm:$0xff]
    %v114 = vld [vmem:[%s2] sm:$0x1]
    %v116 = vperm.slane %v114, 0
    %118 = vmatpush.msra.mxu0 %v113
    %119 = vmatpush.msra.mxu0 %v112
    %120 = vmatpush.msra.mxu0 %v111
    %121 = vmatpush.msra.mxu0 %v110
    %122 = vmatpush.msra.mxu0 %v109
    %123 = vmatpush.msra.mxu0 %v108
    %124 = vmatpush.msra.mxu0 %v107
    %125 = vmatpush.msra.mxu0 %v106
    %126 = vmatpush.msra.mxu0 %v105
    %127 = vmatpush.msra.mxu0 %v104
    %128 = vmatpush.msra.mxu0 %v103
    %129 = vmatpush.msra.mxu0 %v102
    %130 = vmatpush.msra.mxu0 %v101
    %131 = vmatpush.msra.mxu0 %v100
    %132 = vmatpush.msra.mxu0 %v99
    %133 = vmatpush.msra.mxu0 %v98
    %134 = vmatmul.f32.gmra.mxu0 %v90
    %v135 = vpop.f32.mrf.mxu0
    %v136 = vadd.f32 %v116, %v135
    %137 = vmatmul.f32.gmra.mxu0 %v91
    %v138 = vpop.f32.mrf.mxu0
    %v139 = vadd.f32 %v116, %v138
    %140 = vmatmul.f32.gmra.mxu0 %v92
    %v141 = vpop.f32.mrf.mxu0
    %v142 = vadd.f32 %v116, %v141
    %143 = vmatmul.f32.gmra.mxu0 %v93
    %v144 = vpop.f32.mrf.mxu0
    %v145 = vadd.f32 %v116, %v144
    %146 = vmatmul.f32.gmra.mxu0 %v94
    %v147 = vpop.f32.mrf.mxu0
    %v148 = vadd.f32 %v116, %v147
    %149 = vmatmul.f32.gmra.mxu0 %v95
    %v150 = vpop.f32.mrf.mxu0
    %v151 = vadd.f32 %v116, %v150
    %152 = vmatmul.f32.gmra.mxu0 %v96
    %v153 = vpop.f32.mrf.mxu0
    %v154 = vadd.f32 %v116, %v153
    %155 = vmatmul.f32.gmra.mxu0 %v97
    %v156 = vpop.f32.mrf.mxu0
    %v157 = vadd.f32 %v116, %v156
    %158 = vdwg.mxu0
    %159 = vadd.xlane.f32.xlu0 %v136
    %v160 = vpop.xlane.xlu0 %159
    %161 = vadd.xlane.f32.xlu0 %v139
    %v162 = vpop.xlane.xlu0 %161
    %163 = vadd.xlane.f32.xlu0 %v142
    %v164 = vpop.xlane.xlu0 %163
    %165 = vadd.xlane.f32.xlu0 %v145
    %v166 = vpop.xlane.xlu0 %165
    %167 = vadd.xlane.f32.xlu0 %v148
    %v168 = vpop.xlane.xlu0 %167
    %169 = vadd.xlane.f32.xlu0 %v151
    %v170 = vpop.xlane.xlu0 %169
    %171 = vadd.xlane.f32.xlu0 %v154
    %v172 = vpop.xlane.xlu0 %171
    %173 = vadd.xlane.f32.xlu0 %v157
    %v174 = vpop.xlane.xlu0 %173
    %v175 = vmul.f32 %v160, 0.03125
    %v176 = vmul.f32 %v162, 0.03125
    %v177 = vmul.f32 %v164, 0.03125
    %v178 = vmul.f32 %v166, 0.03125
    %v179 = vmul.f32 %v168, 0.03125
    %v180 = vmul.f32 %v170, 0.03125
    %v181 = vmul.f32 %v172, 0.03125
    %v182 = vmul.f32 %v174, 0.03125
    %v183 = vsub.f32 %v136, %v175
    %v184 = vsub.f32 %v139, %v176
    %v185 = vsub.f32 %v142, %v177
    %v186 = vsub.f32 %v145, %v178
    %v187 = vsub.f32 %v148, %v179
    %v188 = vsub.f32 %v151, %v180
    %v189 = vsub.f32 %v154, %v181
    %v190 = vsub.f32 %v157, %v182
    %v191 = vlaneseq
    %v192 = vand.u32 %v191, 127
    %vm193 = vcmp.lt.s32.totalorder %v192, 32
    %v194 = vsel %vm193, 1, 0
    %vm195 = vcmp.eq.s32.totalorder %v194, 1
    %v196 = vsel %vm195, %v183, 0.0
    %v197 = vsel %vm195, %v184, 0.0
    %v198 = vsel %vm195, %v185, 0.0
    %v199 = vsel %vm195, %v186, 0.0
    %v200 = vsel %vm195, %v187, 0.0
    %v201 = vsel %vm195, %v188, 0.0
    %v202 = vsel %vm195, %v189, 0.0
    %v203 = vsel %vm195, %v190, 0.0
    %v204 = vmul.f32 %v196, %v196
    %v205 = vmul.f32 %v197, %v197
    %v206 = vmul.f32 %v198, %v198
    %v207 = vmul.f32 %v199, %v199
    %v208 = vmul.f32 %v200, %v200
    %v209 = vmul.f32 %v201, %v201
    %v210 = vmul.f32 %v202, %v202
    %v211 = vmul.f32 %v203, %v203
    %212 = vadd.xlane.f32.xlu0 %v204
    %v213 = vpop.xlane.xlu0 %212
    %214 = vadd.xlane.f32.xlu0 %v205
    %v215 = vpop.xlane.xlu0 %214
    %216 = vadd.xlane.f32.xlu0 %v206
    %v217 = vpop.xlane.xlu0 %216
    %218 = vadd.xlane.f32.xlu0 %v207
    %v219 = vpop.xlane.xlu0 %218
    %220 = vadd.xlane.f32.xlu0 %v208
    %v221 = vpop.xlane.xlu0 %220
    %222 = vadd.xlane.f32.xlu0 %v209
    %v223 = vpop.xlane.xlu0 %222
    %224 = vadd.xlane.f32.xlu0 %v210
    %v225 = vpop.xlane.xlu0 %224
    %226 = vadd.xlane.f32.xlu0 %v211
    %v227 = vpop.xlane.xlu0 %226
    %v228 = vmul.f32 %v213, 0.03125
    %v229 = vmul.f32 %v215, 0.03125
    %v230 = vmul.f32 %v217, 0.03125
    %v231 = vmul.f32 %v219, 0.03125
    %v232 = vmul.f32 %v221, 0.03125
    %v233 = vmul.f32 %v223, 0.03125
    %v234 = vmul.f32 %v225, 0.03125
    %v235 = vmul.f32 %v227, 0.03125
    %v236 = vld [vmem:[%s3] sm:$0x1]
    %v237 = vadd.f32 %v228, 1e-05
    %v238 = vadd.f32 %v229, 1e-05
    %v239 = vadd.f32 %v230, 1e-05
    %v240 = vadd.f32 %v231, 1e-05
    %v241 = vadd.f32 %v232, 1e-05
    %v242 = vadd.f32 %v233, 1e-05
    %v243 = vadd.f32 %v234, 1e-05
    %v244 = vadd.f32 %v235, 1e-05
    %v245 = vrsqrt.pop %v237
    %v246 = vmul.f32 %v245, %v237
    %v247 = vmul.f32 %v246, %v245
    %v248 = vmul.f32 0.5, %v247
    %v249 = vsub.f32 1.5, %v248
    %v250 = vmul.f32 %v245, %v249
    %vm251 = vweird.f32 %v237
    %vm252 = vweird.f32 %v245
    %vm253 = vmor %vm251, %vm252
    %v254 = vsel %vm253, %v245, %v250
    %v255 = vrsqrt.pop %v238
    %v256 = vmul.f32 %v255, %v238
    %v257 = vmul.f32 %v256, %v255
    %v258 = vmul.f32 0.5, %v257
    %v259 = vsub.f32 1.5, %v258
    %v260 = vmul.f32 %v255, %v259
    %vm261 = vweird.f32 %v238
    %vm262 = vweird.f32 %v255
    %vm263 = vmor %vm261, %vm262
    %v264 = vsel %vm263, %v255, %v260
    %v265 = vrsqrt.pop %v239
    %v266 = vmul.f32 %v265, %v239
    %v267 = vmul.f32 %v266, %v265
    %v268 = vmul.f32 0.5, %v267
    %v269 = vsub.f32 1.5, %v268
    %v270 = vmul.f32 %v265, %v269
    %vm271 = vweird.f32 %v239
    %vm272 = vweird.f32 %v265
    %vm273 = vmor %vm271, %vm272
    %v274 = vsel %vm273, %v265, %v270
    %v275 = vrsqrt.pop %v240
    %v276 = vmul.f32 %v275, %v240
    %v277 = vmul.f32 %v276, %v275
    %v278 = vmul.f32 0.5, %v277
    %v279 = vsub.f32 1.5, %v278
    %v280 = vmul.f32 %v275, %v279
    %vm281 = vweird.f32 %v240
    %vm282 = vweird.f32 %v275
    %vm283 = vmor %vm281, %vm282
    %v284 = vsel %vm283, %v275, %v280
    %v285 = vrsqrt.pop %v241
    %v286 = vmul.f32 %v285, %v241
    %v287 = vmul.f32 %v286, %v285
    %v288 = vmul.f32 0.5, %v287
    %v289 = vsub.f32 1.5, %v288
    %v290 = vmul.f32 %v285, %v289
    %vm291 = vweird.f32 %v241
    %vm292 = vweird.f32 %v285
    %vm293 = vmor %vm291, %vm292
    %v294 = vsel %vm293, %v285, %v290
    %v295 = vrsqrt.pop %v242
    %v296 = vmul.f32 %v295, %v242
    %v297 = vmul.f32 %v296, %v295
    %v298 = vmul.f32 0.5, %v297
    %v299 = vsub.f32 1.5, %v298
    %v300 = vmul.f32 %v295, %v299
    %vm301 = vweird.f32 %v242
    %vm302 = vweird.f32 %v295
    %vm303 = vmor %vm301, %vm302
    %v304 = vsel %vm303, %v295, %v300
    %v305 = vrsqrt.pop %v243
    %v306 = vmul.f32 %v305, %v243
    %v307 = vmul.f32 %v306, %v305
    %v308 = vmul.f32 0.5, %v307
    %v309 = vsub.f32 1.5, %v308
    %v310 = vmul.f32 %v305, %v309
    %vm311 = vweird.f32 %v243
    %vm312 = vweird.f32 %v305
    %vm313 = vmor %vm311, %vm312
    %v314 = vsel %vm313, %v305, %v310
    %v315 = vrsqrt.pop %v244
    %v316 = vmul.f32 %v315, %v244
    %v317 = vmul.f32 %v316, %v315
    %v318 = vmul.f32 0.5, %v317
    %v319 = vsub.f32 1.5, %v318
    %v320 = vmul.f32 %v315, %v319
    %vm321 = vweird.f32 %v244
    %vm322 = vweird.f32 %v315
    %vm323 = vmor %vm321, %vm322
    %v324 = vsel %vm323, %v315, %v320
    %v326 = vperm.slane %v236, 0
    %v328 = vmul.f32 %v326, %v254
    %v329 = vmul.f32 %v326, %v264
    %v330 = vmul.f32 %v326, %v274
    %v331 = vmul.f32 %v326, %v284
    %v332 = vmul.f32 %v326, %v294
    %v333 = vmul.f32 %v326, %v304
    %v334 = vmul.f32 %v326, %v314
    %v335 = vmul.f32 %v326, %v324
    %v336 = vld [vmem:[%s4] sm:$0x1]
    %v337 = vmul.f32 %v175, %v328
    %v338 = vmul.f32 %v176, %v329
    %v339 = vmul.f32 %v177, %v330
    %v340 = vmul.f32 %v178, %v331
    %v341 = vmul.f32 %v179, %v332
    %v342 = vmul.f32 %v180, %v333
    %v343 = vmul.f32 %v181, %v334
    %v344 = vmul.f32 %v182, %v335
    %v346 = vperm.slane %v336, 0
    %v348 = vsub.f32 %v346, %v337
    %v349 = vsub.f32 %v346, %v338
    %v350 = vsub.f32 %v346, %v339
    %v351 = vsub.f32 %v346, %v340
    %v352 = vsub.f32 %v346, %v341
    %v353 = vsub.f32 %v346, %v342
    %v354 = vsub.f32 %v346, %v343
    %v355 = vsub.f32 %v346, %v344
    %v356 = vmul.f32 %v136, %v328
    %v357 = vmul.f32 %v139, %v329
    %v358 = vmul.f32 %v142, %v330
    %v359 = vmul.f32 %v145, %v331
    %v360 = vmul.f32 %v148, %v332
    %v361 = vmul.f32 %v151, %v333
    %v362 = vmul.f32 %v154, %v334
    %v363 = vmul.f32 %v157, %v335
    %v364 = vadd.f32 %v356, %v348
    %v365 = vadd.f32 %v357, %v349
    %v366 = vadd.f32 %v358, %v350
    %v367 = vadd.f32 %v359, %v351
    %v368 = vadd.f32 %v360, %v352
    %v369 = vadd.f32 %v361, %v353
    %v370 = vadd.f32 %v362, %v354
    %v371 = vadd.f32 %v363, %v355
    %v372 = vmax.f32 %v364, 0.0
    %v373 = vmax.f32 %v365, 0.0
    %v374 = vmax.f32 %v366, 0.0
    %v375 = vmax.f32 %v367, 0.0
    %v376 = vmax.f32 %v368, 0.0
    %v377 = vmax.f32 %v369, 0.0
    %v378 = vmax.f32 %v370, 0.0
    %v379 = vmax.f32 %v371, 0.0
    %v380 = vld [vmem:[%s5] sm:$0xff]
    %v381 = vmul.f32 %v372, %v380
    %v382 = vmul.f32 %v373, %v380
    %v383 = vmul.f32 %v374, %v380
    %v384 = vmul.f32 %v375, %v380
    %v385 = vmul.f32 %v376, %v380
    %v386 = vmul.f32 %v377, %v380
    %v387 = vmul.f32 %v378, %v380
    %v388 = vmul.f32 %v379, %v380
    %389 = vadd.xlane.f32.xlu0 %v381
    %v390 = vpop.xlane.xlu0 %389
    %391 = vadd.xlane.f32.xlu0 %v382
    %v392 = vpop.xlane.xlu0 %391
    %393 = vadd.xlane.f32.xlu0 %v383
    %v394 = vpop.xlane.xlu0 %393
    %395 = vadd.xlane.f32.xlu0 %v384
    %v396 = vpop.xlane.xlu0 %395
    %397 = vadd.xlane.f32.xlu0 %v385
    %v398 = vpop.xlane.xlu0 %397
    %399 = vadd.xlane.f32.xlu0 %v386
    %v400 = vpop.xlane.xlu0 %399
    %401 = vadd.xlane.f32.xlu0 %v387
    %v402 = vpop.xlane.xlu0 %401
    %403 = vadd.xlane.f32.xlu0 %v388
    %v404 = vpop.xlane.xlu0 %403
    %v405 = vld [vmem:[%s6] sm:$0x1]
    %v407 = vperm.slane %v405, 0
    %v408 = vlaneseq
    %v409 = vshrl.u32 %v408, 7
    %411 = vset.pattern.permute.xlu0 %v409
    %412 = vperm.xlu0 %411, %v407
    %v413 = vpop.permute.xlu0 %412
    %v415 = vadd.f32 %v390, %v413
    %v416 = vadd.f32 %v392, %v413
    %v417 = vadd.f32 %v394, %v413
    %v418 = vadd.f32 %v396, %v413
    %v419 = vadd.f32 %v398, %v413
    %v420 = vadd.f32 %v400, %v413
    %v421 = vadd.f32 %v402, %v413
    %v422 = vadd.f32 %v404, %v413
    %431 = vset.pattern.permute.xlu0 0
    %432 = vperm.xlu0 %431, %v415
    %v433 = vpop.permute.xlu0 %432
    %434 = vset.pattern.permute.xlu0 0
    %435 = vperm.xlu0 %434, %v416
    %v436 = vpop.permute.xlu0 %435
    %437 = vset.pattern.permute.xlu0 0
    %438 = vperm.xlu0 %437, %v417
    %v439 = vpop.permute.xlu0 %438
    %440 = vset.pattern.permute.xlu0 0
    %441 = vperm.xlu0 %440, %v418
    %v442 = vpop.permute.xlu0 %441
    %443 = vset.pattern.permute.xlu0 0
    %444 = vperm.xlu0 %443, %v419
    %v445 = vpop.permute.xlu0 %444
    %446 = vset.pattern.permute.xlu0 0
    %447 = vperm.xlu0 %446, %v420
    %v448 = vpop.permute.xlu0 %447
    %449 = vset.pattern.permute.xlu0 0
    %450 = vperm.xlu0 %449, %v421
    %v451 = vpop.permute.xlu0 %450
    %452 = vset.pattern.permute.xlu0 0
    %453 = vperm.xlu0 %452, %v422
    %v454 = vpop.permute.xlu0 %453
    %v455 = vperm.slane %v433, %v192
    %v456 = vperm.slane %v436, %v192
    %v457 = vperm.slane %v439, %v192
    %v458 = vperm.slane %v442, %v192
    %v459 = vperm.slane %v445, %v192
    %v460 = vperm.slane %v448, %v192
    %v461 = vperm.slane %v451, %v192
    %v462 = vperm.slane %v454, %v192
    %vm463 = vcmask 1041409
    %v464 = vsel %vm463, %v456, %v455
    %vm465 = vcmask 1042434
    %v466 = vsel %vm465, %v457, %v464
    %vm467 = vcmask 1043459
    %v468 = vsel %vm467, %v458, %v466
    %vm469 = vcmask 1044484
    %v470 = vsel %vm469, %v459, %v468
    %vm471 = vcmask 1045509
    %v472 = vsel %vm471, %v460, %v470
    %vm473 = vcmask 1046534
    %v474 = vsel %vm473, %v461, %v472
    %vm475 = vcmask 1047559
    %v476 = vsel %vm475, %v462, %v474
    %478 = vxpose.xlu0.b32.start [1/16] %v476, 128
    %479 = vxpose.xlu0.b32.cont [2/16] 0.0, 128
    %480 = vxpose.xlu0.b32.cont [3/16] 0.0, 128
    %481 = vxpose.xlu0.b32.cont [4/16] 0.0, 128
    %482 = vxpose.xlu0.b32.cont [5/16] 0.0, 128
    %483 = vxpose.xlu0.b32.cont [6/16] 0.0, 128
    %484 = vxpose.xlu0.b32.cont [7/16] 0.0, 128
    %485 = vxpose.xlu0.b32.cont [8/16] 0.0, 128
    %486 = vxpose.xlu0.b32.cont [9/16] 0.0, 128
    %487 = vxpose.xlu0.b32.cont [10/16] 0.0, 128
    %488 = vxpose.xlu0.b32.cont [11/16] 0.0, 128
    %489 = vxpose.xlu0.b32.cont [12/16] 0.0, 128
    %490 = vxpose.xlu0.b32.cont [13/16] 0.0, 128
    %491 = vxpose.xlu0.b32.cont [14/16] 0.0, 128
    %492 = vxpose.xlu0.b32.cont [15/16] 0.0, 128
    %493 = vxpose.xlu0.b32.end [16/16] 0.0, 128
    %v494 = vpop.trf.xlu0
    %v495 = vpop.trf.xlu0
    %v496 = vpop.trf.xlu0
    %v497 = vpop.trf.xlu0
    %v498 = vpop.trf.xlu0
    %v499 = vpop.trf.xlu0
    %v500 = vpop.trf.xlu0
    %v501 = vpop.trf.xlu0
    %v502 = vpop.trf.xlu0
    %v503 = vpop.trf.xlu0
    %v504 = vpop.trf.xlu0
    %v505 = vpop.trf.xlu0
    %v506 = vpop.trf.xlu0
    %v507 = vpop.trf.xlu0
    %v508 = vpop.trf.xlu0
    %v509 = vpop.trf.xlu0
    %vm510 = vcmask 64512
    %511 = vst.msk [vmem:[#allocation3] sm:$0xff] %vm510, %v494
    // Predicated region
    $region68: #{tpu_custom_call.1} parent=1 // pred_check
      _
    $region69: #{tpu_custom_call.1} parent=1 // pred_check_branch
      %513 = sbr.rel (0) target = $region71
    $region70: #{tpu_custom_call.1} parent=1 // pred_region
      %515 = vsyncadd [#allocation4], 0
      %s517 = sshll.u32 [#allocation3], 4
      %s518 = int_to_ptr.vmem [resolvable:$true] %s517
      %s519 = sshll.u32 %s7, 4
      %s520 = int_to_ptr.hbm [resolvable:$true] %s519
      %522 = dma.vmem_to_hbm [thread:$0]  %s518, 128, %s520, [#allocation4]
    $region71: #{tpu_custom_call.1} parent=1 // pred_fallthru
      _
    // Predicated region
    $region72: #{tpu_custom_call.1} parent=1 // pred_check
      _
    $region73: #{tpu_custom_call.1} parent=1 // pred_check_branch
      %524 = sbr.rel (0) target = $region75
    $region74: #{tpu_custom_call.1} parent=1 // pred_region
      %526 = dma.done [#allocation4], 128
    $region75: #{tpu_custom_call.1} parent=1 // pred_fallthru
      _
    %527 = vsyncpa [#allocation4], 1

// kernel: tpu_custom_call.1
$region0: #{tpu_custom_call.1}
  #allocation0 [shape = 'u32[]', space=smem, size = 0x4, offset = 0x4, fixed_abs, tag = 'smem constant byte address 0x4 - core index']
  #allocation1 [shape = 'u32[72,128]{1,0:T(1,128)}', space=vmem, size = 0x9000, scoped, tag = 'internal scratch']
  %s0 = inlined_call_operand.vmem [shape: f32[8,9,128], index: 0, kind: input, shape index: {}]
  %s1 = inlined_call_operand.vmem [shape: f32[128,128], index: 1, kind: input, shape index: {}]
  %s2 = inlined_call_operand.vmem [shape: f32[1,128], index: 2, kind: input, shape index: {}]
  %s3 = inlined_call_operand.vmem [shape: f32[1,128], index: 3, kind: input, shape index: {}]
  %s4 = inlined_call_operand.vmem [shape: f32[1,128], index: 4, kind: input, shape index: {}]
  %s5 = inlined_call_operand.vmem [shape: f32[8,128], index: 5, kind: input, shape index: {}]
  %s6 = inlined_call_operand.vmem [shape: f32[1,8], index: 6, kind: input, shape index: {}]
  %s7 = inlined_call_operand.hbm [shape: f32[8,8], index: 7, kind: output, shape index: {}]
  %s8 = sld [smem:[#allocation0]]
  $region76: #{tpu_custom_call.1} parent=0
    _
  %s10 = ssub.s32 1, %s8
  %s11 = scalar_select 0, %s10, %s8
  $region1: #{tpu_custom_call.1} parent=0
    #allocation2 [shape = 'u8[32768]{0}', space=vmem, size = 0x8000, scoped, tag = 'input window, operand 0, single buffered']
    #allocation3 [shape = 'u8[4096]{0}', space=vmem, size = 0x1000, scoped, tag = 'output window, operand 0, single buffered']
    #allocation4 [shape = 's32[1]{0}', space=sflag, size = 0x4, scoped, tag = 'scoped memory for tpu_custom_call.1']
    %12 = vsyncpa [#allocation4], 0
    // Predicated region
    $region2: #{tpu_custom_call.1} parent=1 // pred_check
      _
    $region3: #{tpu_custom_call.1} parent=1 // pred_check_branch
      %14 = sbr.rel (0) target = $region5
    $region4: #{tpu_custom_call.1} parent=1 // pred_region
      // Predicated region
      $region6: #{tpu_custom_call.1} parent=4 // pred_check
        _
      $region7: #{tpu_custom_call.1} parent=4 // pred_check_branch
        %16 = sbr.rel (0) target = $region9
      $region8: #{tpu_custom_call.1} parent=4 // pred_region
        // Predicated region
        $region10: #{tpu_custom_call.1} parent=8 // pred_check
          _
        $region11: #{tpu_custom_call.1} parent=8 // pred_check_branch
          %18 = sbr.rel (0) target = $region13
        $region12: #{tpu_custom_call.1} parent=8 // pred_region
          // Predicated region
          $region25: #{tpu_custom_call.1} parent=12 // pred_check
            _
          $region26: #{tpu_custom_call.1} parent=12 // pred_check_branch
            %48 = sbr.rel (0) target = $region28
          $region27: #{tpu_custom_call.1} parent=12 // pred_region
            loop: start=0, step=1, limit=1
            $region29: #{tpu_custom_call.1} parent=27 // loop_pre_header
              _
            $region30: #{tpu_custom_call.1} parent=27 // loop_header
              %s50 = sphi 0, %s54
              %p51 = scmp.ge.s32.totalorder %s50, 1
              %s55 = sphi %s0, %s0
              %s56 = sphi [#allocation2], [#allocation2]
            $region31: #{tpu_custom_call.1} parent=27 // loop_header_branch
              %53 = sbr.rel (%p51) target = $region35
            $region32: #{tpu_custom_call.1} parent=27 // loop_body
              %v57 = vld [vmem:[%s55] sm:$0xff]
              %58 = vst [vmem:[%s56] sm:$0xff] %v57
              %v59 = vld [vmem:[%s55 + $0x10] sm:$0xff]
              %60 = vst [vmem:[%s56 + $0x8] sm:$0xff] %v59
              %v61 = vld [vmem:[%s55 + $0x20] sm:$0xff]
              %62 = vst [vmem:[%s56 + $0x10] sm:$0xff] %v61
              %v63 = vld [vmem:[%s55 + $0x30] sm:$0xff]
              %64 = vst [vmem:[%s56 + $0x18] sm:$0xff] %v63
              %v65 = vld [vmem:[%s55 + $0x40] sm:$0xff]
              %66 = vst [vmem:[%s56 + $0x20] sm:$0xff] %v65
              %v67 = vld [vmem:[%s55 + $0x50] sm:$0xff]
              %68 = vst [vmem:[%s56 + $0x28] sm:$0xff] %v67
              %v69 = vld [vmem:[%s55 + $0x60] sm:$0xff]
              %70 = vst [vmem:[%s56 + $0x30] sm:$0xff] %v69
              %v71 = vld [vmem:[%s55 + $0x70] sm:$0xff]
              %72 = vst [vmem:[%s56 + $0x38] sm:$0xff] %v71
            $region33: #{tpu_custom_call.1} parent=27 // loop_footer
              %s54 = sadd.s32 1, %s50
            $region34: #{tpu_custom_call.1} parent=27 // loop_footer_branch
              %49 = sbr.rel target = $region30
            $region35: #{tpu_custom_call.1} parent=27 // loop_exit
              _
          $region28: #{tpu_custom_call.1} parent=12 // pred_fallthru
            _
          // Predicated region
          $region36: #{tpu_custom_call.1} parent=12 // pred_check
            _
          $region37: #{tpu_custom_call.1} parent=12 // pred_check_branch
            %74 = sbr.rel target = $region39
          $region38: #{tpu_custom_call.1} parent=12 // pred_region
            _
          $region39: #{tpu_custom_call.1} parent=12 // pred_fallthru
            _
        $region13: #{tpu_custom_call.1} parent=8 // pred_fallthru
          _
        // Predicated region
        $region14: #{tpu_custom_call.1} parent=8 // pred_check
          _
        $region15: #{tpu_custom_call.1} parent=8 // pred_check_branch
          %20 = sbr.rel target = $region17
        $region16: #{tpu_custom_call.1} parent=8 // pred_region
          %s22 = ssub.s32 256, 1
          loop: start=0, step=1, limit=1
          $region18: #{tpu_custom_call.1} parent=16 // loop_pre_header
            _
          $region19: #{tpu_custom_call.1} parent=16 // loop_header
            %s24 = sphi 0, %s28
            %p25 = scmp.ge.s32.totalorder %s24, 1
            %s29 = sphi %s0, %s0
            %s30 = sphi [#allocation2], [#allocation2]
          $region20: #{tpu_custom_call.1} parent=16 // loop_header_branch
            %27 = sbr.rel (%p25) target = $region24
          $region21: #{tpu_custom_call.1} parent=16 // loop_body
            %v31 = vld [vmem:[%s29] sm:%s22]
            %32 = vst [vmem:[%s30] sm:%s22] %v31
            %v33 = vld [vmem:[%s29 + $0x10] sm:%s22]
            %34 = vst [vmem:[%s30 + $0x8] sm:%s22] %v33
            %v35 = vld [vmem:[%s29 + $0x20] sm:%s22]
            %36 = vst [vmem:[%s30 + $0x10] sm:%s22] %v35
            %v37 = vld [vmem:[%s29 + $0x30] sm:%s22]
            %38 = vst [vmem:[%s30 + $0x18] sm:%s22] %v37
            %v39 = vld [vmem:[%s29 + $0x40] sm:%s22]
            %40 = vst [vmem:[%s30 + $0x20] sm:%s22] %v39
            %v41 = vld [vmem:[%s29 + $0x50] sm:%s22]
            %42 = vst [vmem:[%s30 + $0x28] sm:%s22] %v41
            %v43 = vld [vmem:[%s29 + $0x60] sm:%s22]
            %44 = vst [vmem:[%s30 + $0x30] sm:%s22] %v43
            %v45 = vld [vmem:[%s29 + $0x70] sm:%s22]
            %46 = vst [vmem:[%s30 + $0x38] sm:%s22] %v45
          $region22: #{tpu_custom_call.1} parent=16 // loop_footer
            %s28 = sadd.s32 1, %s24
          $region23: #{tpu_custom_call.1} parent=16 // loop_footer_branch
            %23 = sbr.rel target = $region19
          $region24: #{tpu_custom_call.1} parent=16 // loop_exit
            _
        $region17: #{tpu_custom_call.1} parent=8 // pred_fallthru
          _
      $region9: #{tpu_custom_call.1} parent=4 // pred_fallthru
        _
      %75 = vnop
    $region5: #{tpu_custom_call.1} parent=1 // pred_fallthru
      _
    // Predicated region
    $region40: #{tpu_custom_call.1} parent=1 // pred_check
      _
    $region41: #{tpu_custom_call.1} parent=1 // pred_check_branch
      %77 = sbr.rel (0) target = $region43
    $region42: #{tpu_custom_call.1} parent=1 // pred_region
      _
    $region43: #{tpu_custom_call.1} parent=1 // pred_fallthru
      _
    // Predicated region
    $region44: #{tpu_custom_call.1} parent=1 // pred_check
      _
    $region45: #{tpu_custom_call.1} parent=1 // pred_check_branch
      %79 = sbr.rel (0) target = $region47
    $region46: #{tpu_custom_call.1} parent=1 // pred_region
      _
    $region47: #{tpu_custom_call.1} parent=1 // pred_fallthru
      _
    // Predicated region
    $region48: #{tpu_custom_call.1} parent=1 // pred_check
      _
    $region49: #{tpu_custom_call.1} parent=1 // pred_check_branch
      %81 = sbr.rel (0) target = $region51
    $region50: #{tpu_custom_call.1} parent=1 // pred_region
      _
    $region51: #{tpu_custom_call.1} parent=1 // pred_fallthru
      _
    // Predicated region
    $region52: #{tpu_custom_call.1} parent=1 // pred_check
      _
    $region53: #{tpu_custom_call.1} parent=1 // pred_check_branch
      %83 = sbr.rel (0) target = $region55
    $region54: #{tpu_custom_call.1} parent=1 // pred_region
      _
    $region55: #{tpu_custom_call.1} parent=1 // pred_fallthru
      _
    // Predicated region
    $region56: #{tpu_custom_call.1} parent=1 // pred_check
      _
    $region57: #{tpu_custom_call.1} parent=1 // pred_check_branch
      %85 = sbr.rel (0) target = $region59
    $region58: #{tpu_custom_call.1} parent=1 // pred_region
      _
    $region59: #{tpu_custom_call.1} parent=1 // pred_fallthru
      _
    // Predicated region
    $region60: #{tpu_custom_call.1} parent=1 // pred_check
      _
    $region61: #{tpu_custom_call.1} parent=1 // pred_check_branch
      %87 = sbr.rel (0) target = $region63
    $region62: #{tpu_custom_call.1} parent=1 // pred_region
      _
    $region63: #{tpu_custom_call.1} parent=1 // pred_fallthru
      _
    // Predicated region
    $region64: #{tpu_custom_call.1} parent=1 // pred_check
      _
    $region65: #{tpu_custom_call.1} parent=1 // pred_check_branch
      %89 = sbr.rel (0) target = $region67
    $region66: #{tpu_custom_call.1} parent=1 // pred_region
      _
    $region67: #{tpu_custom_call.1} parent=1 // pred_fallthru
      _
    %v90 = vld [vmem:[#allocation2] sm:$0xff]
    %v91 = vld [vmem:[#allocation2 + $0x8] sm:$0xff]
    %v92 = vld [vmem:[#allocation2 + $0x10] sm:$0xff]
    %v93 = vld [vmem:[#allocation2 + $0x18] sm:$0xff]
    %v94 = vld [vmem:[#allocation2 + $0x20] sm:$0xff]
    %v95 = vld [vmem:[#allocation2 + $0x28] sm:$0xff]
    %v96 = vld [vmem:[#allocation2 + $0x30] sm:$0xff]
    %v97 = vld [vmem:[#allocation2 + $0x38] sm:$0xff]
    %v98 = vld [vmem:[%s1] sm:$0xff]
    %v99 = vld [vmem:[%s1 + $0x8] sm:$0xff]
    %v100 = vld [vmem:[%s1 + $0x10] sm:$0xff]
    %v101 = vld [vmem:[%s1 + $0x18] sm:$0xff]
    %v102 = vld [vmem:[%s1 + $0x20] sm:$0xff]
    %v103 = vld [vmem:[%s1 + $0x28] sm:$0xff]
    %v104 = vld [vmem:[%s1 + $0x30] sm:$0xff]
    %v105 = vld [vmem:[%s1 + $0x38] sm:$0xff]
    %v106 = vld [vmem:[%s1 + $0x40] sm:$0xff]
    %v107 = vld [vmem:[%s1 + $0x48] sm:$0xff]
    %v108 = vld [vmem:[%s1 + $0x50] sm:$0xff]
    %v109 = vld [vmem:[%s1 + $0x58] sm:$0xff]
    %v110 = vld [vmem:[%s1 + $0x60] sm:$0xff]
    %v111 = vld [vmem:[%s1 + $0x68] sm:$0xff]
    %v112 = vld [vmem:[%s1 + $0x70] sm:$0xff]
    %v113 = vld [vmem:[%s1 + $0x78] sm:$0xff]
    %v114 = vld [vmem:[%s2] sm:$0x1]
    %v116 = vperm.slane %v114, 0
    %118 = vmatpush.msra.mxu0 %v113
    %119 = vmatpush.msra.mxu0 %v112
    %120 = vmatpush.msra.mxu0 %v111
    %121 = vmatpush.msra.mxu0 %v110
    %122 = vmatpush.msra.mxu0 %v109
    %123 = vmatpush.msra.mxu0 %v108
    %124 = vmatpush.msra.mxu0 %v107
    %125 = vmatpush.msra.mxu0 %v106
    %126 = vmatpush.msra.mxu0 %v105
    %127 = vmatpush.msra.mxu0 %v104
    %128 = vmatpush.msra.mxu0 %v103
    %129 = vmatpush.msra.mxu0 %v102
    %130 = vmatpush.msra.mxu0 %v101
    %131 = vmatpush.msra.mxu0 %v100
    %132 = vmatpush.msra.mxu0 %v99
    %133 = vmatpush.msra.mxu0 %v98
    %134 = vmatmul.f32.gmra.mxu0 %v90
    %v135 = vpop.f32.mrf.mxu0
    %v136 = vadd.f32 %v116, %v135
    %137 = vmatmul.f32.gmra.mxu0 %v91
    %v138 = vpop.f32.mrf.mxu0
    %v139 = vadd.f32 %v116, %v138
    %140 = vmatmul.f32.gmra.mxu0 %v92
    %v141 = vpop.f32.mrf.mxu0
    %v142 = vadd.f32 %v116, %v141
    %143 = vmatmul.f32.gmra.mxu0 %v93
    %v144 = vpop.f32.mrf.mxu0
    %v145 = vadd.f32 %v116, %v144
    %146 = vmatmul.f32.gmra.mxu0 %v94
    %v147 = vpop.f32.mrf.mxu0
    %v148 = vadd.f32 %v116, %v147
    %149 = vmatmul.f32.gmra.mxu0 %v95
    %v150 = vpop.f32.mrf.mxu0
    %v151 = vadd.f32 %v116, %v150
    %152 = vmatmul.f32.gmra.mxu0 %v96
    %v153 = vpop.f32.mrf.mxu0
    %v154 = vadd.f32 %v116, %v153
    %155 = vmatmul.f32.gmra.mxu0 %v97
    %v156 = vpop.f32.mrf.mxu0
    %v157 = vadd.f32 %v116, %v156
    %158 = vdwg.mxu0
    %159 = vadd.xlane.f32.xlu0 %v136
    %v160 = vpop.xlane.xlu0 %159
    %161 = vadd.xlane.f32.xlu0 %v139
    %v162 = vpop.xlane.xlu0 %161
    %163 = vadd.xlane.f32.xlu0 %v142
    %v164 = vpop.xlane.xlu0 %163
    %165 = vadd.xlane.f32.xlu0 %v145
    %v166 = vpop.xlane.xlu0 %165
    %167 = vadd.xlane.f32.xlu0 %v148
    %v168 = vpop.xlane.xlu0 %167
    %169 = vadd.xlane.f32.xlu0 %v151
    %v170 = vpop.xlane.xlu0 %169
    %171 = vadd.xlane.f32.xlu0 %v154
    %v172 = vpop.xlane.xlu0 %171
    %173 = vadd.xlane.f32.xlu0 %v157
    %v174 = vpop.xlane.xlu0 %173
    %v175 = vmul.f32 %v160, 0.03125
    %v176 = vmul.f32 %v162, 0.03125
    %v177 = vmul.f32 %v164, 0.03125
    %v178 = vmul.f32 %v166, 0.03125
    %v179 = vmul.f32 %v168, 0.03125
    %v180 = vmul.f32 %v170, 0.03125
    %v181 = vmul.f32 %v172, 0.03125
    %v182 = vmul.f32 %v174, 0.03125
    %v183 = vsub.f32 %v136, %v175
    %v184 = vsub.f32 %v139, %v176
    %v185 = vsub.f32 %v142, %v177
    %v186 = vsub.f32 %v145, %v178
    %v187 = vsub.f32 %v148, %v179
    %v188 = vsub.f32 %v151, %v180
    %v189 = vsub.f32 %v154, %v181
    %v190 = vsub.f32 %v157, %v182
    %v191 = vlaneseq
    %v192 = vand.u32 %v191, 127
    %vm193 = vcmp.lt.s32.totalorder %v192, 32
    %v194 = vsel %vm193, 1, 0
    %vm195 = vcmp.eq.s32.totalorder %v194, 1
    %v196 = vsel %vm195, %v183, 0.0
    %v197 = vsel %vm195, %v184, 0.0
    %v198 = vsel %vm195, %v185, 0.0
    %v199 = vsel %vm195, %v186, 0.0
    %v200 = vsel %vm195, %v187, 0.0
    %v201 = vsel %vm195, %v188, 0.0
    %v202 = vsel %vm195, %v189, 0.0
    %v203 = vsel %vm195, %v190, 0.0
    %v204 = vmul.f32 %v196, %v196
    %v205 = vmul.f32 %v197, %v197
    %v206 = vmul.f32 %v198, %v198
    %v207 = vmul.f32 %v199, %v199
    %v208 = vmul.f32 %v200, %v200
    %v209 = vmul.f32 %v201, %v201
    %v210 = vmul.f32 %v202, %v202
    %v211 = vmul.f32 %v203, %v203
    %212 = vadd.xlane.f32.xlu0 %v204
    %v213 = vpop.xlane.xlu0 %212
    %214 = vadd.xlane.f32.xlu0 %v205
    %v215 = vpop.xlane.xlu0 %214
    %216 = vadd.xlane.f32.xlu0 %v206
    %v217 = vpop.xlane.xlu0 %216
    %218 = vadd.xlane.f32.xlu0 %v207
    %v219 = vpop.xlane.xlu0 %218
    %220 = vadd.xlane.f32.xlu0 %v208
    %v221 = vpop.xlane.xlu0 %220
    %222 = vadd.xlane.f32.xlu0 %v209
    %v223 = vpop.xlane.xlu0 %222
    %224 = vadd.xlane.f32.xlu0 %v210
    %v225 = vpop.xlane.xlu0 %224
    %226 = vadd.xlane.f32.xlu0 %v211
    %v227 = vpop.xlane.xlu0 %226
    %v228 = vmul.f32 %v213, 0.03125
    %v229 = vmul.f32 %v215, 0.03125
    %v230 = vmul.f32 %v217, 0.03125
    %v231 = vmul.f32 %v219, 0.03125
    %v232 = vmul.f32 %v221, 0.03125
    %v233 = vmul.f32 %v223, 0.03125
    %v234 = vmul.f32 %v225, 0.03125
    %v235 = vmul.f32 %v227, 0.03125
    %v236 = vld [vmem:[%s3] sm:$0x1]
    %v237 = vadd.f32 %v228, 1e-05
    %v238 = vadd.f32 %v229, 1e-05
    %v239 = vadd.f32 %v230, 1e-05
    %v240 = vadd.f32 %v231, 1e-05
    %v241 = vadd.f32 %v232, 1e-05
    %v242 = vadd.f32 %v233, 1e-05
    %v243 = vadd.f32 %v234, 1e-05
    %v244 = vadd.f32 %v235, 1e-05
    %v245 = vrsqrt.pop %v237
    %v246 = vmul.f32 %v245, %v237
    %v247 = vmul.f32 %v246, %v245
    %v248 = vmul.f32 0.5, %v247
    %v249 = vsub.f32 1.5, %v248
    %v250 = vmul.f32 %v245, %v249
    %vm251 = vweird.f32 %v237
    %vm252 = vweird.f32 %v245
    %vm253 = vmor %vm251, %vm252
    %v254 = vsel %vm253, %v245, %v250
    %v255 = vrsqrt.pop %v238
    %v256 = vmul.f32 %v255, %v238
    %v257 = vmul.f32 %v256, %v255
    %v258 = vmul.f32 0.5, %v257
    %v259 = vsub.f32 1.5, %v258
    %v260 = vmul.f32 %v255, %v259
    %vm261 = vweird.f32 %v238
    %vm262 = vweird.f32 %v255
    %vm263 = vmor %vm261, %vm262
    %v264 = vsel %vm263, %v255, %v260
    %v265 = vrsqrt.pop %v239
    %v266 = vmul.f32 %v265, %v239
    %v267 = vmul.f32 %v266, %v265
    %v268 = vmul.f32 0.5, %v267
    %v269 = vsub.f32 1.5, %v268
    %v270 = vmul.f32 %v265, %v269
    %vm271 = vweird.f32 %v239
    %vm272 = vweird.f32 %v265
    %vm273 = vmor %vm271, %vm272
    %v274 = vsel %vm273, %v265, %v270
    %v275 = vrsqrt.pop %v240
    %v276 = vmul.f32 %v275, %v240
    %v277 = vmul.f32 %v276, %v275
    %v278 = vmul.f32 0.5, %v277
    %v279 = vsub.f32 1.5, %v278
    %v280 = vmul.f32 %v275, %v279
    %vm281 = vweird.f32 %v240
    %vm282 = vweird.f32 %v275
    %vm283 = vmor %vm281, %vm282
    %v284 = vsel %vm283, %v275, %v280
    %v285 = vrsqrt.pop %v241
    %v286 = vmul.f32 %v285, %v241
    %v287 = vmul.f32 %v286, %v285
    %v288 = vmul.f32 0.5, %v287
    %v289 = vsub.f32 1.5, %v288
    %v290 = vmul.f32 %v285, %v289
    %vm291 = vweird.f32 %v241
    %vm292 = vweird.f32 %v285
    %vm293 = vmor %vm291, %vm292
    %v294 = vsel %vm293, %v285, %v290
    %v295 = vrsqrt.pop %v242
    %v296 = vmul.f32 %v295, %v242
    %v297 = vmul.f32 %v296, %v295
    %v298 = vmul.f32 0.5, %v297
    %v299 = vsub.f32 1.5, %v298
    %v300 = vmul.f32 %v295, %v299
    %vm301 = vweird.f32 %v242
    %vm302 = vweird.f32 %v295
    %vm303 = vmor %vm301, %vm302
    %v304 = vsel %vm303, %v295, %v300
    %v305 = vrsqrt.pop %v243
    %v306 = vmul.f32 %v305, %v243
    %v307 = vmul.f32 %v306, %v305
    %v308 = vmul.f32 0.5, %v307
    %v309 = vsub.f32 1.5, %v308
    %v310 = vmul.f32 %v305, %v309
    %vm311 = vweird.f32 %v243
    %vm312 = vweird.f32 %v305
    %vm313 = vmor %vm311, %vm312
    %v314 = vsel %vm313, %v305, %v310
    %v315 = vrsqrt.pop %v244
    %v316 = vmul.f32 %v315, %v244
    %v317 = vmul.f32 %v316, %v315
    %v318 = vmul.f32 0.5, %v317
    %v319 = vsub.f32 1.5, %v318
    %v320 = vmul.f32 %v315, %v319
    %vm321 = vweird.f32 %v244
    %vm322 = vweird.f32 %v315
    %vm323 = vmor %vm321, %vm322
    %v324 = vsel %vm323, %v315, %v320
    %v326 = vperm.slane %v236, 0
    %v328 = vmul.f32 %v326, %v254
    %v329 = vmul.f32 %v326, %v264
    %v330 = vmul.f32 %v326, %v274
    %v331 = vmul.f32 %v326, %v284
    %v332 = vmul.f32 %v326, %v294
    %v333 = vmul.f32 %v326, %v304
    %v334 = vmul.f32 %v326, %v314
    %v335 = vmul.f32 %v326, %v324
    %v336 = vld [vmem:[%s4] sm:$0x1]
    %v337 = vmul.f32 %v175, %v328
    %v338 = vmul.f32 %v176, %v329
    %v339 = vmul.f32 %v177, %v330
    %v340 = vmul.f32 %v178, %v331
    %v341 = vmul.f32 %v179, %v332
    %v342 = vmul.f32 %v180, %v333
    %v343 = vmul.f32 %v181, %v334
    %v344 = vmul.f32 %v182, %v335
    %v346 = vperm.slane %v336, 0
    %v348 = vsub.f32 %v346, %v337
    %v349 = vsub.f32 %v346, %v338
    %v350 = vsub.f32 %v346, %v339
    %v351 = vsub.f32 %v346, %v340
    %v352 = vsub.f32 %v346, %v341
    %v353 = vsub.f32 %v346, %v342
    %v354 = vsub.f32 %v346, %v343
    %v355 = vsub.f32 %v346, %v344
    %v356 = vmul.f32 %v136, %v328
    %v357 = vmul.f32 %v139, %v329
    %v358 = vmul.f32 %v142, %v330
    %v359 = vmul.f32 %v145, %v331
    %v360 = vmul.f32 %v148, %v332
    %v361 = vmul.f32 %v151, %v333
    %v362 = vmul.f32 %v154, %v334
    %v363 = vmul.f32 %v157, %v335
    %v364 = vadd.f32 %v356, %v348
    %v365 = vadd.f32 %v357, %v349
    %v366 = vadd.f32 %v358, %v350
    %v367 = vadd.f32 %v359, %v351
    %v368 = vadd.f32 %v360, %v352
    %v369 = vadd.f32 %v361, %v353
    %v370 = vadd.f32 %v362, %v354
    %v371 = vadd.f32 %v363, %v355
    %v372 = vmax.f32 %v364, 0.0
    %v373 = vmax.f32 %v365, 0.0
    %v374 = vmax.f32 %v366, 0.0
    %v375 = vmax.f32 %v367, 0.0
    %v376 = vmax.f32 %v368, 0.0
    %v377 = vmax.f32 %v369, 0.0
    %v378 = vmax.f32 %v370, 0.0
    %v379 = vmax.f32 %v371, 0.0
    %v380 = vld [vmem:[%s5] sm:$0xff]
    %v381 = vmul.f32 %v372, %v380
    %v382 = vmul.f32 %v373, %v380
    %v383 = vmul.f32 %v374, %v380
    %v384 = vmul.f32 %v375, %v380
    %v385 = vmul.f32 %v376, %v380
    %v386 = vmul.f32 %v377, %v380
    %v387 = vmul.f32 %v378, %v380
    %v388 = vmul.f32 %v379, %v380
    %389 = vadd.xlane.f32.xlu0 %v381
    %v390 = vpop.xlane.xlu0 %389
    %391 = vadd.xlane.f32.xlu0 %v382
    %v392 = vpop.xlane.xlu0 %391
    %393 = vadd.xlane.f32.xlu0 %v383
    %v394 = vpop.xlane.xlu0 %393
    %395 = vadd.xlane.f32.xlu0 %v384
    %v396 = vpop.xlane.xlu0 %395
    %397 = vadd.xlane.f32.xlu0 %v385
    %v398 = vpop.xlane.xlu0 %397
    %399 = vadd.xlane.f32.xlu0 %v386
    %v400 = vpop.xlane.xlu0 %399
    %401 = vadd.xlane.f32.xlu0 %v387
    %v402 = vpop.xlane.xlu0 %401
    %403 = vadd.xlane.f32.xlu0 %v388
    %v404 = vpop.xlane.xlu0 %403
    %v405 = vld [vmem:[%s6] sm:$0x1]
    %v407 = vperm.slane %v405, 0
    %v408 = vlaneseq
    %v409 = vshrl.u32 %v408, 7
    %411 = vset.pattern.permute.xlu0 %v409
    %412 = vperm.xlu0 %411, %v407
    %v413 = vpop.permute.xlu0 %412
    %v415 = vadd.f32 %v390, %v413
    %v416 = vadd.f32 %v392, %v413
    %v417 = vadd.f32 %v394, %v413
    %v418 = vadd.f32 %v396, %v413
    %v419 = vadd.f32 %v398, %v413
    %v420 = vadd.f32 %v400, %v413
    %v421 = vadd.f32 %v402, %v413
    %v422 = vadd.f32 %v404, %v413
    %431 = vset.pattern.permute.xlu0 0
    %432 = vperm.xlu0 %431, %v415
    %v433 = vpop.permute.xlu0 %432
    %434 = vset.pattern.permute.xlu0 0
    %435 = vperm.xlu0 %434, %v416
    %v436 = vpop.permute.xlu0 %435
    %437 = vset.pattern.permute.xlu0 0
    %438 = vperm.xlu0 %437, %v417
    %v439 = vpop.permute.xlu0 %438
    %440 = vset.pattern.permute.xlu0 0
    %441 = vperm.xlu0 %440, %v418
    %v442 = vpop.permute.xlu0 %441
    %443 = vset.pattern.permute.xlu0 0
    %444 = vperm.xlu0 %443, %v419
    %v445 = vpop.permute.xlu0 %444
    %446 = vset.pattern.permute.xlu0 0
    %447 = vperm.xlu0 %446, %v420
    %v448 = vpop.permute.xlu0 %447
    %449 = vset.pattern.permute.xlu0 0
    %450 = vperm.xlu0 %449, %v421
    %v451 = vpop.permute.xlu0 %450
    %452 = vset.pattern.permute.xlu0 0
    %453 = vperm.xlu0 %452, %v422
    %v454 = vpop.permute.xlu0 %453
    %v455 = vperm.slane %v433, %v192
    %v456 = vperm.slane %v436, %v192
    %v457 = vperm.slane %v439, %v192
    %v458 = vperm.slane %v442, %v192
    %v459 = vperm.slane %v445, %v192
    %v460 = vperm.slane %v448, %v192
    %v461 = vperm.slane %v451, %v192
    %v462 = vperm.slane %v454, %v192
    %vm463 = vcmask 1041409
    %v464 = vsel %vm463, %v456, %v455
    %vm465 = vcmask 1042434
    %v466 = vsel %vm465, %v457, %v464
    %vm467 = vcmask 1043459
    %v468 = vsel %vm467, %v458, %v466
    %vm469 = vcmask 1044484
    %v470 = vsel %vm469, %v459, %v468
    %vm471 = vcmask 1045509
    %v472 = vsel %vm471, %v460, %v470
    %vm473 = vcmask 1046534
    %v474 = vsel %vm473, %v461, %v472
    %vm475 = vcmask 1047559
    %v476 = vsel %vm475, %v462, %v474
    %478 = vxpose.xlu0.b32.start [1/16] %v476, 128
    %479 = vxpose.xlu0.b32.cont [2/16] 0.0, 128
    %480 = vxpose.xlu0.b32.cont [3/16] 0.0, 128
    %481 = vxpose.xlu0.b32.cont [4/16] 0.0, 128
    %482 = vxpose.xlu0.b32.cont [5/16] 0.0, 128
    %483 = vxpose.xlu0.b32.cont [6/16] 0.0, 128
    %484 = vxpose.xlu0.b32.cont [7/16] 0.0, 128
    %485 = vxpose.xlu0.b32.cont [8/16] 0.0, 128
    %486 = vxpose.xlu0.b32.cont [9/16] 0.0, 128
    %487 = vxpose.xlu0.b32.cont [10/16] 0.0, 128
    %488 = vxpose.xlu0.b32.cont [11/16] 0.0, 128
    %489 = vxpose.xlu0.b32.cont [12/16] 0.0, 128
    %490 = vxpose.xlu0.b32.cont [13/16] 0.0, 128
    %491 = vxpose.xlu0.b32.cont [14/16] 0.0, 128
    %492 = vxpose.xlu0.b32.cont [15/16] 0.0, 128
    %493 = vxpose.xlu0.b32.end [16/16] 0.0, 128
    %v494 = vpop.trf.xlu0
    %v495 = vpop.trf.xlu0
    %v496 = vpop.trf.xlu0
    %v497 = vpop.trf.xlu0
    %v498 = vpop.trf.xlu0
    %v499 = vpop.trf.xlu0
    %v500 = vpop.trf.xlu0
    %v501 = vpop.trf.xlu0
    %v502 = vpop.trf.xlu0
    %v503 = vpop.trf.xlu0
    %v504 = vpop.trf.xlu0
    %v505 = vpop.trf.xlu0
    %v506 = vpop.trf.xlu0
    %v507 = vpop.trf.xlu0
    %v508 = vpop.trf.xlu0
    %v509 = vpop.trf.xlu0
    %vm510 = vcmask 64512
    %511 = vst.msk [vmem:[#allocation3] sm:$0xff] %vm510, %v494
    // Predicated region
    $region68: #{tpu_custom_call.1} parent=1 // pred_check
      _
    $region69: #{tpu_custom_call.1} parent=1 // pred_check_branch
      %513 = sbr.rel (0) target = $region71
    $region70: #{tpu_custom_call.1} parent=1 // pred_region
      %515 = vsyncadd [#allocation4], 0
      %s517 = sshll.u32 [#allocation3], 4
      %s518 = int_to_ptr.vmem [resolvable:$true] %s517
      %s519 = sshll.u32 %s7, 4
      %s520 = int_to_ptr.hbm [resolvable:$true] %s519
      %522 = dma.vmem_to_hbm [thread:$0]  %s518, 128, %s520, [#allocation4]
    $region71: #{tpu_custom_call.1} parent=1 // pred_fallthru
      _
    // Predicated region
    $region72: #{tpu_custom_call.1} parent=1 // pred_check
      _
    $region73: #{tpu_custom_call.1} parent=1 // pred_check_branch
      %524 = sbr.rel (0) target = $region75
    $region74: #{tpu_custom_call.1} parent=1 // pred_region
      %526 = dma.done [#allocation4], 128
    $region75: #{tpu_custom_call.1} parent=1 // pred_fallthru
      _
    %527 = vsyncpa [#allocation4], 1

</llo_original>
